<compile_context>
chip_gen: v7x
topology: tpu7x:2x2x1
jax: 0.10.0
libtpu: 0.0.40
codegen_flags: <defaults>
</compile_context>

<pallas_src>
import functools

import jax
import jax.numpy as jnp
import numpy as np
from jax import lax
from jax.experimental import pallas as pl
from jax.experimental.pallas import tpu as pltpu

HID_DIM = 32
N_HEADS = 4
HEAD_DIM = HID_DIM // N_HEADS
DROPOUT_P = 0.1  # TODO(synk): dropout on attention is identity here (eval mode).


def _mha_kernel(x_ref, wqkv_ref, bqkv_ref, wo_ref, bo_ref,
                out_ref, att_ref, ctx_ref,
                *, batch, seq_len, hid_dim, n_heads, head_dim):
    # Fused Q/K/V projection: one MXU matmul covering all batch rows and all
    # three projections (block-diagonal weight, inputs concatenated on lanes).
    qkv = jnp.dot(x_ref[...], wqkv_ref[...],
                  preferred_element_type=jnp.float32) + bqkv_ref[...]

    inv_scale = 1.0 / float(np.sqrt(head_dim))  # multiply, don't divide

    # Static fully-unrolled loop over (batch, head): 8 tiny blocks at this toy
    # size.  At realistic L this would become a "parallel" grid axis (and on
    # v7x be split across the two TensorCores).
    for b in range(batch):
        r0 = b * seq_len
        for h in range(n_heads):
            cq = h * head_dim
            ck = hid_dim + h * head_dim
            cv = 2 * hid_dim + h * head_dim
            q_h = qkv[r0:r0 + seq_len, cq:cq + head_dim]      # (L, d)
            k_h = qkv[r0:r0 + seq_len, ck:ck + head_dim]      # (L, d)
            v_h = qkv[r0:r0 + seq_len, cv:cv + head_dim]      # (L, d)

            # energy[q, k] = sum_d Q[q, d] * K[k, d]   (no materialized K^T)
            energy = lax.dot_general(
                q_h, k_h, (((1,), (1,)), ((), ())),
                preferred_element_type=jnp.float32) * inv_scale   # (L, L)

            # Numerically stable softmax; divide only the (L, 1) row sums.
            m = jnp.max(energy, axis=-1, keepdims=True)
            e = jnp.exp(energy - m)
            attn = e * (1.0 / jnp.sum(e, axis=-1, keepdims=True))

            # Lane-dense packed attention output: heads side by side on lanes.
            att_ref[r0:r0 + seq_len, h * seq_len:(h + 1) * seq_len] = (
                attn.astype(att_ref.dtype))

            # Per-head context written at its lane offset (no jnp.concatenate).
            ctx_ref[r0:r0 + seq_len, cq:cq + head_dim] = jnp.dot(
                attn, v_h, preferred_element_type=jnp.float32)

    # Output projection for all batch rows at once.
    out = jnp.dot(ctx_ref[...], wo_ref[...],
                  preferred_element_type=jnp.float32) + bo_ref[...]
    out_ref[...] = out.astype(out_ref.dtype)


def mha_forward(query, key, value, params, *, n_heads=N_HEADS):
    B, L, H = query.shape
    d = H // n_heads

    # ---- wrapper-side layout plumbing (weight prep, lane packing) ----
    wq_t, wk_t, wv_t, wo_t = (params[k].T for k in ("wq", "wk", "wv", "wo"))
    w_qkv = jnp.zeros((3 * H, 3 * H), jnp.float32)
    w_qkv = (w_qkv.at[0:H, 0:H].set(wq_t)
                  .at[H:2 * H, H:2 * H].set(wk_t)
                  .at[2 * H:3 * H, 2 * H:3 * H].set(wv_t))
    b_qkv = jnp.concatenate(
        [params["bq"], params["bk"], params["bv"]]).reshape(1, 3 * H)
    bo = params["bo"].reshape(1, H)

    # Concatenate the three inputs on lanes and merge batch into rows.
    x_cat = jnp.concatenate([query, key, value], axis=-1).reshape(B * L, 3 * H)

    kernel = functools.partial(_mha_kernel, batch=B, seq_len=L, hid_dim=H,
                               n_heads=n_heads, head_dim=d)
    vmem = pl.BlockSpec(memory_space=pltpu.MemorySpace.VMEM)

    out2d, att2d = pl.pallas_call(
        kernel,
        out_shape=(
            jax.ShapeDtypeStruct((B * L, H), jnp.float32),
            jax.ShapeDtypeStruct((B * L, n_heads * L), jnp.float32),
        ),
        in_specs=[vmem, vmem, vmem, vmem, vmem],
        out_specs=(vmem, vmem),
        scratch_shapes=[pltpu.VMEM((B * L, H), jnp.float32)],
    )(x_cat, w_qkv, b_qkv, wo_t, bo)

    x = out2d.reshape(B, L, H)
    attention = att2d.reshape(B, L, n_heads, L).transpose(0, 2, 1, 3)
    return x, attention


def init_params(key, hid_dim):
    # Mirrors nn.Linear default init: U(-1/sqrt(in), 1/sqrt(in)) for W and b.
    bound = 1.0 / np.sqrt(hid_dim)
    keys = jax.random.split(key, 8)

    def u(k, shape):
        return jax.random.uniform(k, shape, jnp.float32, -bound, bound)

    return {
        "wq": u(keys[0], (hid_dim, hid_dim)), "bq": u(keys[1], (hid_dim,)),
        "wk": u(keys[2], (hid_dim, hid_dim)), "bk": u(keys[3], (hid_dim,)),
        "wv": u(keys[4], (hid_dim, hid_dim)), "bv": u(keys[5], (hid_dim,)),
        "wo": u(keys[6], (hid_dim, hid_dim)), "bo": u(keys[7], (hid_dim,)),
    }


def mha_reference(query, key, value, params, *, n_heads=N_HEADS):
    # Pure-JAX reference mirroring the PyTorch forward (mask=None, eval mode).
    B, L, H = query.shape
    d = H // n_heads

    def lin(x, w, b):
        return x @ w.T + b

    Q = lin(query, params["wq"], params["bq"]).reshape(B, L, n_heads, d).transpose(0, 2, 1, 3)
    K = lin(key,   params["wk"], params["bk"]).reshape(B, L, n_heads, d).transpose(0, 2, 1, 3)
    V = lin(value, params["wv"], params["bv"]).reshape(B, L, n_heads, d).transpose(0, 2, 1, 3)
    energy = jnp.einsum("bhqd,bhkd->bhqk", Q, K) / jnp.sqrt(jnp.float32(d))
    attention = jax.nn.softmax(energy, axis=-1)
    x = jnp.einsum("bhqk,bhkd->bhqd", attention, V)
    x = x.transpose(0, 2, 1, 3).reshape(B, L, H)
    x = lin(x, params["wo"], params["bo"])
    return x, attention


if __name__ == "__main__":
    B, L, H = 2, 8, HID_DIM

    root = jax.random.PRNGKey(0)
    k_q, k_k, k_v, k_p = jax.random.split(root, 4)
    query = jax.random.normal(k_q, (B, L, H), jnp.float32)
    key_in = jax.random.normal(k_k, (B, L, H), jnp.float32)
    value = jax.random.normal(k_v, (B, L, H), jnp.float32)
    params = init_params(k_p, H)

    out, att = mha_forward(query, key_in, value, params)
    jax.block_until_ready((out, att))

    out_ref, att_ref = mha_reference(query, key_in, value, params)
    np.testing.assert_allclose(np.asarray(out), np.asarray(out_ref), atol=2e-5, rtol=2e-5)
    np.testing.assert_allclose(np.asarray(att), np.asarray(att_ref), atol=2e-5, rtol=2e-5)

    print("KERNEL_OK")
</pallas_src>

<mosaic_0001>
module attributes {stable_mosaic.version = 11 : i64} {
  func.func @_mha_kernel(%arg0: memref<16x96xf32, #tpu.memory_space<vmem>>, %arg1: memref<96x96xf32, #tpu.memory_space<vmem>>, %arg2: memref<1x96xf32, #tpu.memory_space<vmem>>, %arg3: memref<32x32xf32, #tpu.memory_space<vmem>>, %arg4: memref<1x32xf32, #tpu.memory_space<vmem>>, %arg5: memref<16x32xf32, #tpu.memory_space<vmem>>, %arg6: memref<16x32xf32, #tpu.memory_space<vmem>>, %arg7: memref<16x32xf32, #tpu.memory_space<vmem>>) attributes {dimension_semantics = [], scalar_prefetch = 0 : i64, scratch_operands = 1 : i64, tpu.core_type = #tpu.core_type<tc>} {
    %c0 = arith.constant 0 : index
    %c0_0 = arith.constant 0 : index
    %0 = vector.load %arg0[%c0, %c0_0] : memref<16x96xf32, #tpu.memory_space<vmem>>, vector<16x96xf32>
    %c0_1 = arith.constant 0 : index
    %c0_2 = arith.constant 0 : index
    %1 = vector.load %arg1[%c0_1, %c0_2] : memref<96x96xf32, #tpu.memory_space<vmem>>, vector<96x96xf32>
    %cst = arith.constant dense<0.000000e+00> : vector<16x96xf32>
    %2 = tpu.matmul %0, %1, %cst {dimension_numbers = #tpu.dot_dimension_numbers<[1], [0], [0], [1], [0, 0, 1, 1], [], []>} : vector<16x96xf32>, vector<96x96xf32>, vector<16x96xf32> -> vector<16x96xf32>
    %c0_3 = arith.constant 0 : index
    %c0_4 = arith.constant 0 : index
    %3 = vector.load %arg2[%c0_3, %c0_4] : memref<1x96xf32, #tpu.memory_space<vmem>>, vector<1x96xf32>
    %4 = vector.broadcast %3 : vector<1x96xf32> to vector<16x96xf32>
    %5 = arith.addf %2, %4 : vector<16x96xf32>
    %6 = vector.extract_strided_slice %5 {offsets = [0, 0], sizes = [8, 8], strides = [1, 1]} : vector<16x96xf32> to vector<8x8xf32>
    %7 = vector.extract_strided_slice %5 {offsets = [0, 32], sizes = [8, 8], strides = [1, 1]} : vector<16x96xf32> to vector<8x8xf32>
    %8 = vector.extract_strided_slice %5 {offsets = [0, 64], sizes = [8, 8], strides = [1, 1]} : vector<16x96xf32> to vector<8x8xf32>
    %cst_5 = arith.constant dense<0.000000e+00> : vector<8x8xf32>
    %9 = tpu.matmul %6, %7, %cst_5 {dimension_numbers = #tpu.dot_dimension_numbers<[1], [1], [0], [0], [0, 0, 1, 0], [], []>} : vector<8x8xf32>, vector<8x8xf32>, vector<8x8xf32> -> vector<8x8xf32>
    %cst_6 = arith.constant 0.353553385 : f32
    %10 = vector.broadcast %cst_6 : f32 to vector<8x8xf32>
    %11 = arith.mulf %9, %10 : vector<8x8xf32>
    %cst_7 = arith.constant dense<0xFF800000> : vector<8xf32>
    %12 = vector.multi_reduction <maximumf>, %11, %cst_7 [1] : vector<8x8xf32> to vector<8xf32>
    %13 = vector.shape_cast %12 : vector<8xf32> to vector<8x1xf32>
    %14 = vector.broadcast %13 : vector<8x1xf32> to vector<8x8xf32>
    %15 = arith.subf %11, %14 : vector<8x8xf32>
    %16 = math.exp %15 : vector<8x8xf32>
    %cst_8 = arith.constant dense<0.000000e+00> : vector<8xf32>
    %17 = vector.multi_reduction <add>, %16, %cst_8 [1] : vector<8x8xf32> to vector<8xf32>
    %18 = vector.shape_cast %17 : vector<8xf32> to vector<8x1xf32>
    %cst_9 = arith.constant 1.000000e+00 : f32
    %19 = vector.broadcast %cst_9 : f32 to vector<8x1xf32>
    %20 = arith.divf %19, %18 : vector<8x1xf32>
    %21 = vector.broadcast %20 : vector<8x1xf32> to vector<8x8xf32>
    %22 = arith.mulf %16, %21 : vector<8x8xf32>
    %c0_10 = arith.constant 0 : index
    %c0_11 = arith.constant 0 : index
    %23 = vector.load %arg6[%c0_10, %c0_11] : memref<16x32xf32, #tpu.memory_space<vmem>>, vector<8x8xf32>
    tpu.vector_store %arg6[%c0_10, %c0_11], %22 {strides = array<i32>} : memref<16x32xf32, #tpu.memory_space<vmem>>, vector<8x8xf32>,
    %cst_12 = arith.constant dense<0.000000e+00> : vector<8x8xf32>
    %24 = tpu.matmul %22, %8, %cst_12 {dimension_numbers = #tpu.dot_dimension_numbers<[1], [0], [0], [1], [0, 0, 1, 1], [], []>} : vector<8x8xf32>, vector<8x8xf32>, vector<8x8xf32> -> vector<8x8xf32>
    %c0_13 = arith.constant 0 : index
    %c0_14 = arith.constant 0 : index
    %25 = vector.load %arg7[%c0_13, %c0_14] : memref<16x32xf32, #tpu.memory_space<vmem>>, vector<8x8xf32>
    tpu.vector_store %arg7[%c0_13, %c0_14], %24 {strides = array<i32>} : memref<16x32xf32, #tpu.memory_space<vmem>>, vector<8x8xf32>,
    %26 = vector.extract_strided_slice %5 {offsets = [0, 8], sizes = [8, 8], strides = [1, 1]} : vector<16x96xf32> to vector<8x8xf32>
    %27 = vector.extract_strided_slice %5 {offsets = [0, 40], sizes = [8, 8], strides = [1, 1]} : vector<16x96xf32> to vector<8x8xf32>
    %28 = vector.extract_strided_slice %5 {offsets = [0, 72], sizes = [8, 8], strides = [1, 1]} : vector<16x96xf32> to vector<8x8xf32>
    %cst_15 = arith.constant dense<0.000000e+00> : vector<8x8xf32>
    %29 = tpu.matmul %26, %27, %cst_15 {dimension_numbers = #tpu.dot_dimension_numbers<[1], [1], [0], [0], [0, 0, 1, 0], [], []>} : vector<8x8xf32>, vector<8x8xf32>, vector<8x8xf32> -> vector<8x8xf32>
    %cst_16 = arith.constant 0.353553385 : f32
    %30 = vector.broadcast %cst_16 : f32 to vector<8x8xf32>
    %31 = arith.mulf %29, %30 : vector<8x8xf32>
    %cst_17 = arith.constant dense<0xFF800000> : vector<8xf32>
    %32 = vector.multi_reduction <maximumf>, %31, %cst_17 [1] : vector<8x8xf32> to vector<8xf32>
    %33 = vector.shape_cast %32 : vector<8xf32> to vector<8x1xf32>
    %34 = vector.broadcast %33 : vector<8x1xf32> to vector<8x8xf32>
    %35 = arith.subf %31, %34 : vector<8x8xf32>
    %36 = math.exp %35 : vector<8x8xf32>
    %cst_18 = arith.constant dense<0.000000e+00> : vector<8xf32>
    %37 = vector.multi_reduction <add>, %36, %cst_18 [1] : vector<8x8xf32> to vector<8xf32>
    %38 = vector.shape_cast %37 : vector<8xf32> to vector<8x1xf32>
    %cst_19 = arith.constant 1.000000e+00 : f32
    %39 = vector.broadcast %cst_19 : f32 to vector<8x1xf32>
    %40 = arith.divf %39, %38 : vector<8x1xf32>
    %41 = vector.broadcast %40 : vector<8x1xf32> to vector<8x8xf32>
    %42 = arith.mulf %36, %41 : vector<8x8xf32>
    %c0_20 = arith.constant 0 : index
    %c8 = arith.constant 8 : index
    %43 = vector.load %arg6[%c0_20, %c8] : memref<16x32xf32, #tpu.memory_space<vmem>>, vector<8x8xf32>
    tpu.vector_store %arg6[%c0_20, %c8], %42 {strides = array<i32>} : memref<16x32xf32, #tpu.memory_space<vmem>>, vector<8x8xf32>,
    %cst_21 = arith.constant dense<0.000000e+00> : vector<8x8xf32>
    %44 = tpu.matmul %42, %28, %cst_21 {dimension_numbers = #tpu.dot_dimension_numbers<[1], [0], [0], [1], [0, 0, 1, 1], [], []>} : vector<8x8xf32>, vector<8x8xf32>, vector<8x8xf32> -> vector<8x8xf32>
    %c0_22 = arith.constant 0 : index
    %c8_23 = arith.constant 8 : index
    %45 = vector.load %arg7[%c0_22, %c8_23] : memref<16x32xf32, #tpu.memory_space<vmem>>, vector<8x8xf32>
    tpu.vector_store %arg7[%c0_22, %c8_23], %44 {strides = array<i32>} : memref<16x32xf32, #tpu.memory_space<vmem>>, vector<8x8xf32>,
    %46 = vector.extract_strided_slice %5 {offsets = [0, 16], sizes = [8, 8], strides = [1, 1]} : vector<16x96xf32> to vector<8x8xf32>
    %47 = vector.extract_strided_slice %5 {offsets = [0, 48], sizes = [8, 8], strides = [1, 1]} : vector<16x96xf32> to vector<8x8xf32>
    %48 = vector.extract_strided_slice %5 {offsets = [0, 80], sizes = [8, 8], strides = [1, 1]} : vector<16x96xf32> to vector<8x8xf32>
    %cst_24 = arith.constant dense<0.000000e+00> : vector<8x8xf32>
    %49 = tpu.matmul %46, %47, %cst_24 {dimension_numbers = #tpu.dot_dimension_numbers<[1], [1], [0], [0], [0, 0, 1, 0], [], []>} : vector<8x8xf32>, vector<8x8xf32>, vector<8x8xf32> -> vector<8x8xf32>
    %cst_25 = arith.constant 0.353553385 : f32
    %50 = vector.broadcast %cst_25 : f32 to vector<8x8xf32>
    %51 = arith.mulf %49, %50 : vector<8x8xf32>
    %cst_26 = arith.constant dense<0xFF800000> : vector<8xf32>
    %52 = vector.multi_reduction <maximumf>, %51, %cst_26 [1] : vector<8x8xf32> to vector<8xf32>
    %53 = vector.shape_cast %52 : vector<8xf32> to vector<8x1xf32>
    %54 = vector.broadcast %53 : vector<8x1xf32> to vector<8x8xf32>
    %55 = arith.subf %51, %54 : vector<8x8xf32>
    %56 = math.exp %55 : vector<8x8xf32>
    %cst_27 = arith.constant dense<0.000000e+00> : vector<8xf32>
    %57 = vector.multi_reduction <add>, %56, %cst_27 [1] : vector<8x8xf32> to vector<8xf32>
    %58 = vector.shape_cast %57 : vector<8xf32> to vector<8x1xf32>
    %cst_28 = arith.constant 1.000000e+00 : f32
    %59 = vector.broadcast %cst_28 : f32 to vector<8x1xf32>
    %60 = arith.divf %59, %58 : vector<8x1xf32>
    %61 = vector.broadcast %60 : vector<8x1xf32> to vector<8x8xf32>
    %62 = arith.mulf %56, %61 : vector<8x8xf32>
    %c0_29 = arith.constant 0 : index
    %c16 = arith.constant 16 : index
    %63 = vector.load %arg6[%c0_29, %c16] : memref<16x32xf32, #tpu.memory_space<vmem>>, vector<8x8xf32>
    tpu.vector_store %arg6[%c0_29, %c16], %62 {strides = array<i32>} : memref<16x32xf32, #tpu.memory_space<vmem>>, vector<8x8xf32>,
    %cst_30 = arith.constant dense<0.000000e+00> : vector<8x8xf32>
    %64 = tpu.matmul %62, %48, %cst_30 {dimension_numbers = #tpu.dot_dimension_numbers<[1], [0], [0], [1], [0, 0, 1, 1], [], []>} : vector<8x8xf32>, vector<8x8xf32>, vector<8x8xf32> -> vector<8x8xf32>
    %c0_31 = arith.constant 0 : index
    %c16_32 = arith.constant 16 : index
    %65 = vector.load %arg7[%c0_31, %c16_32] : memref<16x32xf32, #tpu.memory_space<vmem>>, vector<8x8xf32>
    tpu.vector_store %arg7[%c0_31, %c16_32], %64 {strides = array<i32>} : memref<16x32xf32, #tpu.memory_space<vmem>>, vector<8x8xf32>,
    %66 = vector.extract_strided_slice %5 {offsets = [0, 24], sizes = [8, 8], strides = [1, 1]} : vector<16x96xf32> to vector<8x8xf32>
    %67 = vector.extract_strided_slice %5 {offsets = [0, 56], sizes = [8, 8], strides = [1, 1]} : vector<16x96xf32> to vector<8x8xf32>
    %68 = vector.extract_strided_slice %5 {offsets = [0, 88], sizes = [8, 8], strides = [1, 1]} : vector<16x96xf32> to vector<8x8xf32>
    %cst_33 = arith.constant dense<0.000000e+00> : vector<8x8xf32>
    %69 = tpu.matmul %66, %67, %cst_33 {dimension_numbers = #tpu.dot_dimension_numbers<[1], [1], [0], [0], [0, 0, 1, 0], [], []>} : vector<8x8xf32>, vector<8x8xf32>, vector<8x8xf32> -> vector<8x8xf32>
    %cst_34 = arith.constant 0.353553385 : f32
    %70 = vector.broadcast %cst_34 : f32 to vector<8x8xf32>
    %71 = arith.mulf %69, %70 : vector<8x8xf32>
    %cst_35 = arith.constant dense<0xFF800000> : vector<8xf32>
    %72 = vector.multi_reduction <maximumf>, %71, %cst_35 [1] : vector<8x8xf32> to vector<8xf32>
    %73 = vector.shape_cast %72 : vector<8xf32> to vector<8x1xf32>
    %74 = vector.broadcast %73 : vector<8x1xf32> to vector<8x8xf32>
    %75 = arith.subf %71, %74 : vector<8x8xf32>
    %76 = math.exp %75 : vector<8x8xf32>
    %cst_36 = arith.constant dense<0.000000e+00> : vector<8xf32>
    %77 = vector.multi_reduction <add>, %76, %cst_36 [1] : vector<8x8xf32> to vector<8xf32>
    %78 = vector.shape_cast %77 : vector<8xf32> to vector<8x1xf32>
    %cst_37 = arith.constant 1.000000e+00 : f32
    %79 = vector.broadcast %cst_37 : f32 to vector<8x1xf32>
    %80 = arith.divf %79, %78 : vector<8x1xf32>
    %81 = vector.broadcast %80 : vector<8x1xf32> to vector<8x8xf32>
    %82 = arith.mulf %76, %81 : vector<8x8xf32>
    %c0_38 = arith.constant 0 : index
    %c24 = arith.constant 24 : index
    %83 = vector.load %arg6[%c0_38, %c24] : memref<16x32xf32, #tpu.memory_space<vmem>>, vector<8x8xf32>
    tpu.vector_store %arg6[%c0_38, %c24], %82 {strides = array<i32>} : memref<16x32xf32, #tpu.memory_space<vmem>>, vector<8x8xf32>,
    %cst_39 = arith.constant dense<0.000000e+00> : vector<8x8xf32>
    %84 = tpu.matmul %82, %68, %cst_39 {dimension_numbers = #tpu.dot_dimension_numbers<[1], [0], [0], [1], [0, 0, 1, 1], [], []>} : vector<8x8xf32>, vector<8x8xf32>, vector<8x8xf32> -> vector<8x8xf32>
    %c0_40 = arith.constant 0 : index
    %c24_41 = arith.constant 24 : index
    %85 = vector.load %arg7[%c0_40, %c24_41] : memref<16x32xf32, #tpu.memory_space<vmem>>, vector<8x8xf32>
    tpu.vector_store %arg7[%c0_40, %c24_41], %84 {strides = array<i32>} : memref<16x32xf32, #tpu.memory_space<vmem>>, vector<8x8xf32>,
    %86 = vector.extract_strided_slice %5 {offsets = [8, 0], sizes = [8, 8], strides = [1, 1]} : vector<16x96xf32> to vector<8x8xf32>
    %87 = vector.extract_strided_slice %5 {offsets = [8, 32], sizes = [8, 8], strides = [1, 1]} : vector<16x96xf32> to vector<8x8xf32>
    %88 = vector.extract_strided_slice %5 {offsets = [8, 64], sizes = [8, 8], strides = [1, 1]} : vector<16x96xf32> to vector<8x8xf32>
    %cst_42 = arith.constant dense<0.000000e+00> : vector<8x8xf32>
    %89 = tpu.matmul %86, %87, %cst_42 {dimension_numbers = #tpu.dot_dimension_numbers<[1], [1], [0], [0], [0, 0, 1, 0], [], []>} : vector<8x8xf32>, vector<8x8xf32>, vector<8x8xf32> -> vector<8x8xf32>
    %cst_43 = arith.constant 0.353553385 : f32
    %90 = vector.broadcast %cst_43 : f32 to vector<8x8xf32>
    %91 = arith.mulf %89, %90 : vector<8x8xf32>
    %cst_44 = arith.constant dense<0xFF800000> : vector<8xf32>
    %92 = vector.multi_reduction <maximumf>, %91, %cst_44 [1] : vector<8x8xf32> to vector<8xf32>
    %93 = vector.shape_cast %92 : vector<8xf32> to vector<8x1xf32>
    %94 = vector.broadcast %93 : vector<8x1xf32> to vector<8x8xf32>
    %95 = arith.subf %91, %94 : vector<8x8xf32>
    %96 = math.exp %95 : vector<8x8xf32>
    %cst_45 = arith.constant dense<0.000000e+00> : vector<8xf32>
    %97 = vector.multi_reduction <add>, %96, %cst_45 [1] : vector<8x8xf32> to vector<8xf32>
    %98 = vector.shape_cast %97 : vector<8xf32> to vector<8x1xf32>
    %cst_46 = arith.constant 1.000000e+00 : f32
    %99 = vector.broadcast %cst_46 : f32 to vector<8x1xf32>
    %100 = arith.divf %99, %98 : vector<8x1xf32>
    %101 = vector.broadcast %100 : vector<8x1xf32> to vector<8x8xf32>
    %102 = arith.mulf %96, %101 : vector<8x8xf32>
    %c8_47 = arith.constant 8 : index
    %c0_48 = arith.constant 0 : index
    %103 = vector.load %arg6[%c8_47, %c0_48] : memref<16x32xf32, #tpu.memory_space<vmem>>, vector<8x8xf32>
    tpu.vector_store %arg6[%c8_47, %c0_48], %102 {strides = array<i32>} : memref<16x32xf32, #tpu.memory_space<vmem>>, vector<8x8xf32>,
    %cst_49 = arith.constant dense<0.000000e+00> : vector<8x8xf32>
    %104 = tpu.matmul %102, %88, %cst_49 {dimension_numbers = #tpu.dot_dimension_numbers<[1], [0], [0], [1], [0, 0, 1, 1], [], []>} : vector<8x8xf32>, vector<8x8xf32>, vector<8x8xf32> -> vector<8x8xf32>
    %c8_50 = arith.constant 8 : index
    %c0_51 = arith.constant 0 : index
    %105 = vector.load %arg7[%c8_50, %c0_51] : memref<16x32xf32, #tpu.memory_space<vmem>>, vector<8x8xf32>
    tpu.vector_store %arg7[%c8_50, %c0_51], %104 {strides = array<i32>} : memref<16x32xf32, #tpu.memory_space<vmem>>, vector<8x8xf32>,
    %106 = vector.extract_strided_slice %5 {offsets = [8, 8], sizes = [8, 8], strides = [1, 1]} : vector<16x96xf32> to vector<8x8xf32>
    %107 = vector.extract_strided_slice %5 {offsets = [8, 40], sizes = [8, 8], strides = [1, 1]} : vector<16x96xf32> to vector<8x8xf32>
    %108 = vector.extract_strided_slice %5 {offsets = [8, 72], sizes = [8, 8], strides = [1, 1]} : vector<16x96xf32> to vector<8x8xf32>
    %cst_52 = arith.constant dense<0.000000e+00> : vector<8x8xf32>
    %109 = tpu.matmul %106, %107, %cst_52 {dimension_numbers = #tpu.dot_dimension_numbers<[1], [1], [0], [0], [0, 0, 1, 0], [], []>} : vector<8x8xf32>, vector<8x8xf32>, vector<8x8xf32> -> vector<8x8xf32>
    %cst_53 = arith.constant 0.353553385 : f32
    %110 = vector.broadcast %cst_53 : f32 to vector<8x8xf32>
    %111 = arith.mulf %109, %110 : vector<8x8xf32>
    %cst_54 = arith.constant dense<0xFF800000> : vector<8xf32>
    %112 = vector.multi_reduction <maximumf>, %111, %cst_54 [1] : vector<8x8xf32> to vector<8xf32>
    %113 = vector.shape_cast %112 : vector<8xf32> to vector<8x1xf32>
    %114 = vector.broadcast %113 : vector<8x1xf32> to vector<8x8xf32>
    %115 = arith.subf %111, %114 : vector<8x8xf32>
    %116 = math.exp %115 : vector<8x8xf32>
    %cst_55 = arith.constant dense<0.000000e+00> : vector<8xf32>
    %117 = vector.multi_reduction <add>, %116, %cst_55 [1] : vector<8x8xf32> to vector<8xf32>
    %118 = vector.shape_cast %117 : vector<8xf32> to vector<8x1xf32>
    %cst_56 = arith.constant 1.000000e+00 : f32
    %119 = vector.broadcast %cst_56 : f32 to vector<8x1xf32>
    %120 = arith.divf %119, %118 : vector<8x1xf32>
    %121 = vector.broadcast %120 : vector<8x1xf32> to vector<8x8xf32>
    %122 = arith.mulf %116, %121 : vector<8x8xf32>
    %c8_57 = arith.constant 8 : index
    %c8_58 = arith.constant 8 : index
    %123 = vector.load %arg6[%c8_57, %c8_58] : memref<16x32xf32, #tpu.memory_space<vmem>>, vector<8x8xf32>
    tpu.vector_store %arg6[%c8_57, %c8_58], %122 {strides = array<i32>} : memref<16x32xf32, #tpu.memory_space<vmem>>, vector<8x8xf32>,
    %cst_59 = arith.constant dense<0.000000e+00> : vector<8x8xf32>
    %124 = tpu.matmul %122, %108, %cst_59 {dimension_numbers = #tpu.dot_dimension_numbers<[1], [0], [0], [1], [0, 0, 1, 1], [], []>} : vector<8x8xf32>, vector<8x8xf32>, vector<8x8xf32> -> vector<8x8xf32>
    %c8_60 = arith.constant 8 : index
    %c8_61 = arith.constant 8 : index
    %125 = vector.load %arg7[%c8_60, %c8_61] : memref<16x32xf32, #tpu.memory_space<vmem>>, vector<8x8xf32>
    tpu.vector_store %arg7[%c8_60, %c8_61], %124 {strides = array<i32>} : memref<16x32xf32, #tpu.memory_space<vmem>>, vector<8x8xf32>,
    %126 = vector.extract_strided_slice %5 {offsets = [8, 16], sizes = [8, 8], strides = [1, 1]} : vector<16x96xf32> to vector<8x8xf32>
    %127 = vector.extract_strided_slice %5 {offsets = [8, 48], sizes = [8, 8], strides = [1, 1]} : vector<16x96xf32> to vector<8x8xf32>
    %128 = vector.extract_strided_slice %5 {offsets = [8, 80], sizes = [8, 8], strides = [1, 1]} : vector<16x96xf32> to vector<8x8xf32>
    %cst_62 = arith.constant dense<0.000000e+00> : vector<8x8xf32>
    %129 = tpu.matmul %126, %127, %cst_62 {dimension_numbers = #tpu.dot_dimension_numbers<[1], [1], [0], [0], [0, 0, 1, 0], [], []>} : vector<8x8xf32>, vector<8x8xf32>, vector<8x8xf32> -> vector<8x8xf32>
    %cst_63 = arith.constant 0.353553385 : f32
    %130 = vector.broadcast %cst_63 : f32 to vector<8x8xf32>
    %131 = arith.mulf %129, %130 : vector<8x8xf32>
    %cst_64 = arith.constant dense<0xFF800000> : vector<8xf32>
    %132 = vector.multi_reduction <maximumf>, %131, %cst_64 [1] : vector<8x8xf32> to vector<8xf32>
    %133 = vector.shape_cast %132 : vector<8xf32> to vector<8x1xf32>
    %134 = vector.broadcast %133 : vector<8x1xf32> to vector<8x8xf32>
    %135 = arith.subf %131, %134 : vector<8x8xf32>
    %136 = math.exp %135 : vector<8x8xf32>
    %cst_65 = arith.constant dense<0.000000e+00> : vector<8xf32>
    %137 = vector.multi_reduction <add>, %136, %cst_65 [1] : vector<8x8xf32> to vector<8xf32>
    %138 = vector.shape_cast %137 : vector<8xf32> to vector<8x1xf32>
    %cst_66 = arith.constant 1.000000e+00 : f32
    %139 = vector.broadcast %cst_66 : f32 to vector<8x1xf32>
    %140 = arith.divf %139, %138 : vector<8x1xf32>
    %141 = vector.broadcast %140 : vector<8x1xf32> to vector<8x8xf32>
    %142 = arith.mulf %136, %141 : vector<8x8xf32>
    %c8_67 = arith.constant 8 : index
    %c16_68 = arith.constant 16 : index
    %143 = vector.load %arg6[%c8_67, %c16_68] : memref<16x32xf32, #tpu.memory_space<vmem>>, vector<8x8xf32>
    tpu.vector_store %arg6[%c8_67, %c16_68], %142 {strides = array<i32>} : memref<16x32xf32, #tpu.memory_space<vmem>>, vector<8x8xf32>,
    %cst_69 = arith.constant dense<0.000000e+00> : vector<8x8xf32>
    %144 = tpu.matmul %142, %128, %cst_69 {dimension_numbers = #tpu.dot_dimension_numbers<[1], [0], [0], [1], [0, 0, 1, 1], [], []>} : vector<8x8xf32>, vector<8x8xf32>, vector<8x8xf32> -> vector<8x8xf32>
    %c8_70 = arith.constant 8 : index
    %c16_71 = arith.constant 16 : index
    %145 = vector.load %arg7[%c8_70, %c16_71] : memref<16x32xf32, #tpu.memory_space<vmem>>, vector<8x8xf32>
    tpu.vector_store %arg7[%c8_70, %c16_71], %144 {strides = array<i32>} : memref<16x32xf32, #tpu.memory_space<vmem>>, vector<8x8xf32>,
    %146 = vector.extract_strided_slice %5 {offsets = [8, 24], sizes = [8, 8], strides = [1, 1]} : vector<16x96xf32> to vector<8x8xf32>
    %147 = vector.extract_strided_slice %5 {offsets = [8, 56], sizes = [8, 8], strides = [1, 1]} : vector<16x96xf32> to vector<8x8xf32>
    %148 = vector.extract_strided_slice %5 {offsets = [8, 88], sizes = [8, 8], strides = [1, 1]} : vector<16x96xf32> to vector<8x8xf32>
    %cst_72 = arith.constant dense<0.000000e+00> : vector<8x8xf32>
    %149 = tpu.matmul %146, %147, %cst_72 {dimension_numbers = #tpu.dot_dimension_numbers<[1], [1], [0], [0], [0, 0, 1, 0], [], []>} : vector<8x8xf32>, vector<8x8xf32>, vector<8x8xf32> -> vector<8x8xf32>
    %cst_73 = arith.constant 0.353553385 : f32
    %150 = vector.broadcast %cst_73 : f32 to vector<8x8xf32>
    %151 = arith.mulf %149, %150 : vector<8x8xf32>
    %cst_74 = arith.constant dense<0xFF800000> : vector<8xf32>
    %152 = vector.multi_reduction <maximumf>, %151, %cst_74 [1] : vector<8x8xf32> to vector<8xf32>
    %153 = vector.shape_cast %152 : vector<8xf32> to vector<8x1xf32>
    %154 = vector.broadcast %153 : vector<8x1xf32> to vector<8x8xf32>
    %155 = arith.subf %151, %154 : vector<8x8xf32>
    %156 = math.exp %155 : vector<8x8xf32>
    %cst_75 = arith.constant dense<0.000000e+00> : vector<8xf32>
    %157 = vector.multi_reduction <add>, %156, %cst_75 [1] : vector<8x8xf32> to vector<8xf32>
    %158 = vector.shape_cast %157 : vector<8xf32> to vector<8x1xf32>
    %cst_76 = arith.constant 1.000000e+00 : f32
    %159 = vector.broadcast %cst_76 : f32 to vector<8x1xf32>
    %160 = arith.divf %159, %158 : vector<8x1xf32>
    %161 = vector.broadcast %160 : vector<8x1xf32> to vector<8x8xf32>
    %162 = arith.mulf %156, %161 : vector<8x8xf32>
    %c8_77 = arith.constant 8 : index
    %c24_78 = arith.constant 24 : index
    %163 = vector.load %arg6[%c8_77, %c24_78] : memref<16x32xf32, #tpu.memory_space<vmem>>, vector<8x8xf32>
    tpu.vector_store %arg6[%c8_77, %c24_78], %162 {strides = array<i32>} : memref<16x32xf32, #tpu.memory_space<vmem>>, vector<8x8xf32>,
    %cst_79 = arith.constant dense<0.000000e+00> : vector<8x8xf32>
    %164 = tpu.matmul %162, %148, %cst_79 {dimension_numbers = #tpu.dot_dimension_numbers<[1], [0], [0], [1], [0, 0, 1, 1], [], []>} : vector<8x8xf32>, vector<8x8xf32>, vector<8x8xf32> -> vector<8x8xf32>
    %c8_80 = arith.constant 8 : index
    %c24_81 = arith.constant 24 : index
    %165 = vector.load %arg7[%c8_80, %c24_81] : memref<16x32xf32, #tpu.memory_space<vmem>>, vector<8x8xf32>
    tpu.vector_store %arg7[%c8_80, %c24_81], %164 {strides = array<i32>} : memref<16x32xf32, #tpu.memory_space<vmem>>, vector<8x8xf32>,
    %c0_82 = arith.constant 0 : index
    %c0_83 = arith.constant 0 : index
    %166 = vector.load %arg7[%c0_82, %c0_83] : memref<16x32xf32, #tpu.memory_space<vmem>>, vector<16x32xf32>
    %c0_84 = arith.constant 0 : index
    %c0_85 = arith.constant 0 : index
    %167 = vector.load %arg3[%c0_84, %c0_85] : memref<32x32xf32, #tpu.memory_space<vmem>>, vector<32x32xf32>
    %cst_86 = arith.constant dense<0.000000e+00> : vector<16x32xf32>
    %168 = tpu.matmul %166, %167, %cst_86 {dimension_numbers = #tpu.dot_dimension_numbers<[1], [0], [0], [1], [0, 0, 1, 1], [], []>} : vector<16x32xf32>, vector<32x32xf32>, vector<16x32xf32> -> vector<16x32xf32>
    %c0_87 = arith.constant 0 : index
    %c0_88 = arith.constant 0 : index
    %169 = vector.load %arg4[%c0_87, %c0_88] : memref<1x32xf32, #tpu.memory_space<vmem>>, vector<1x32xf32>
    %170 = vector.broadcast %169 : vector<1x32xf32> to vector<16x32xf32>
    %171 = arith.addf %168, %170 : vector<16x32xf32>
    %c0_89 = arith.constant 0 : index
    %c0_90 = arith.constant 0 : index
    %172 = vector.load %arg5[%c0_89, %c0_90] : memref<16x32xf32, #tpu.memory_space<vmem>>, vector<16x32xf32>
    tpu.vector_store %arg5[%c0_89, %c0_90], %171 {strides = array<i32>} : memref<16x32xf32, #tpu.memory_space<vmem>>, vector<16x32xf32>,
    return
  }
}

</mosaic_0001>

<llo_original>
// kernel: tpu_custom_call.1
$region0: #{tpu_custom_call.1}
  #allocation0 [shape = 'u32[]', space=smem, size = 0x4, offset = 0x4, fixed_abs, tag = 'smem constant byte address 0x4 - core index']
  #allocation1 [shape = 'u32[144,128]{1,0:T(1,128)}', space=vmem, size = 0x12000, scoped, tag = 'internal scratch']
  #allocation2 [shape = 'f32[16,32]{1,0:T(8,128)}', space=vmem, size = 0x2000, scoped, tag = 'scratch operand']
  %s0 = inlined_call_operand.hbm [shape: f32[16,96], index: 0, kind: input, shape index: {}]
  %s1 = inlined_call_operand.hbm [shape: f32[96,96], index: 1, kind: input, shape index: {}]
  %s2 = inlined_call_operand.vmem [shape: f32[1,96], index: 2, kind: input, shape index: {}]
  %s3 = inlined_call_operand.hbm [shape: f32[32,32], index: 3, kind: input, shape index: {}]
  %s4 = inlined_call_operand.vmem [shape: f32[1,32], index: 4, kind: input, shape index: {}]
  %s5 = inlined_call_operand.hbm [shape: f32[16,32], index: 5, kind: output, shape index: {0}]
  %s6 = inlined_call_operand.hbm [shape: f32[16,32], index: 6, kind: output, shape index: {1}]
  %7 = xla_tuple %s5, %s6
  %s8 = sld [smem:[#allocation0]]
  $region50: #{tpu_custom_call.1} parent=0
    _
  %s10 = ssub.s32 1, %s8
  %s11 = scalar_select 0, %s10, %s8
  $region1: #{tpu_custom_call.1} parent=0
    #allocation3 [shape = 'u8[8192]{0}', space=vmem, size = 0x2000, scoped, tag = 'input window, operand 0, single buffered']
    #allocation4 [shape = 's32[1]{0}', space=sflag, size = 0x4, scoped, tag = 'scoped memory for tpu_custom_call.1']
    #allocation5 [shape = 's32[1]{0}', space=sflag, size = 0x4, scoped, tag = 'scoped memory for tpu_custom_call.1']
    #allocation6 [shape = 'u8[49152]{0}', space=vmem, size = 0xc000, scoped, tag = 'input window, operand 1, single buffered']
    #allocation7 [shape = 's32[1]{0}', space=sflag, size = 0x4, scoped, tag = 'scoped memory for tpu_custom_call.1']
    #allocation8 [shape = 'u8[16384]{0}', space=vmem, size = 0x4000, scoped, tag = 'input window, operand 3, single buffered']
    #allocation9 [shape = 'u8[8192]{0}', space=vmem, size = 0x2000, scoped, tag = 'output window, operand 0, single buffered']
    #allocation10 [shape = 'u8[8192]{0}', space=vmem, size = 0x2000, scoped, tag = 'output window, operand 1, single buffered']
    #allocation11 [shape = 's32[1]{0}', space=sflag, size = 0x4, scoped, tag = 'scoped memory for tpu_custom_call.1']
    %12 = vsyncpa [#allocation4], 0
    %13 = vsyncpa [#allocation7], 0
    %14 = vsyncpa [#allocation5], 0
    %15 = vsyncpa [#allocation11], 0
    // Predicated region
    $region2: #{tpu_custom_call.1} parent=1 // pred_check
      _
    $region3: #{tpu_custom_call.1} parent=1 // pred_check_branch
      %17 = sbr.rel (0) target = $region5
    $region4: #{tpu_custom_call.1} parent=1 // pred_region
      %s19 = ssub.s32 256, 256
      %20 = vsyncadd [#allocation4], %s19
      %s21 = sshll.u32 [#allocation3], 4
      %s22 = int_to_ptr.vmem [resolvable:$true] %s21
      %27 = dma.hbm_to_vmem [thread:$0]  %s0, 256, %s22, [#allocation4], 128, 128, 8
    $region5: #{tpu_custom_call.1} parent=1 // pred_fallthru
      _
    // Predicated region
    $region6: #{tpu_custom_call.1} parent=1 // pred_check
      _
    $region7: #{tpu_custom_call.1} parent=1 // pred_check_branch
      %29 = sbr.rel (0) target = $region9
    $region8: #{tpu_custom_call.1} parent=1 // pred_region
      %s31 = ssub.s32 1536, 1536
      %32 = vsyncadd [#allocation7], %s31
      %s33 = sshll.u32 [#allocation6], 4
      %s34 = int_to_ptr.vmem [resolvable:$true] %s33
      %39 = dma.hbm_to_vmem [thread:$0]  %s1, 1536, %s34, [#allocation7], 128, 128, 8
    $region9: #{tpu_custom_call.1} parent=1 // pred_fallthru
      _
    // Predicated region
    $region10: #{tpu_custom_call.1} parent=1 // pred_check
      _
    $region11: #{tpu_custom_call.1} parent=1 // pred_check_branch
      %41 = sbr.rel (0) target = $region13
    $region12: #{tpu_custom_call.1} parent=1 // pred_region
      _
    $region13: #{tpu_custom_call.1} parent=1 // pred_fallthru
      _
    // Predicated region
    $region14: #{tpu_custom_call.1} parent=1 // pred_check
      _
    $region15: #{tpu_custom_call.1} parent=1 // pred_check_branch
      %43 = sbr.rel (0) target = $region17
    $region16: #{tpu_custom_call.1} parent=1 // pred_region
      %s45 = ssub.s32 512, 512
      %46 = vsyncadd [#allocation7], %s45
      %s47 = sshll.u32 [#allocation8], 4
      %s48 = int_to_ptr.vmem [resolvable:$true] %s47
      %53 = dma.hbm_to_vmem [thread:$0]  %s3, 512, %s48, [#allocation7], 128, 128, 8
    $region17: #{tpu_custom_call.1} parent=1 // pred_fallthru
      _
    // Predicated region
    $region18: #{tpu_custom_call.1} parent=1 // pred_check
      _
    $region19: #{tpu_custom_call.1} parent=1 // pred_check_branch
      %55 = sbr.rel (0) target = $region21
    $region20: #{tpu_custom_call.1} parent=1 // pred_region
      _
    $region21: #{tpu_custom_call.1} parent=1 // pred_fallthru
      _
    // Predicated region
    $region22: #{tpu_custom_call.1} parent=1 // pred_check
      _
    $region23: #{tpu_custom_call.1} parent=1 // pred_check_branch
      %57 = sbr.rel (0) target = $region25
    $region24: #{tpu_custom_call.1} parent=1 // pred_region
      %58 = dma.done [#allocation4], 256
    $region25: #{tpu_custom_call.1} parent=1 // pred_fallthru
      _
    // Predicated region
    $region26: #{tpu_custom_call.1} parent=1 // pred_check
      _
    $region27: #{tpu_custom_call.1} parent=1 // pred_check_branch
      %60 = sbr.rel (0) target = $region29
    $region28: #{tpu_custom_call.1} parent=1 // pred_region
      %61 = dma.done [#allocation7], 1536
    $region29: #{tpu_custom_call.1} parent=1 // pred_fallthru
      _
    // Predicated region
    $region30: #{tpu_custom_call.1} parent=1 // pred_check
      _
    $region31: #{tpu_custom_call.1} parent=1 // pred_check_branch
      %63 = sbr.rel (0) target = $region33
    $region32: #{tpu_custom_call.1} parent=1 // pred_region
      %64 = dma.done [#allocation7], 512
    $region33: #{tpu_custom_call.1} parent=1 // pred_fallthru
      _
    %v65 = vld [vmem:[#allocation3] sm:$0xff]
    %v66 = vld [vmem:[#allocation3 + $0x8] sm:$0xff]
    %v67 = vld [vmem:[#allocation6] sm:$0xff]
    %v68 = vld [vmem:[#allocation6 + $0x8] sm:$0xff]
    %v69 = vld [vmem:[#allocation6 + $0x10] sm:$0xff]
    %v70 = vld [vmem:[#allocation6 + $0x18] sm:$0xff]
    %v71 = vld [vmem:[#allocation6 + $0x20] sm:$0xff]
    %v72 = vld [vmem:[#allocation6 + $0x28] sm:$0xff]
    %v73 = vld [vmem:[#allocation6 + $0x30] sm:$0xff]
    %v74 = vld [vmem:[#allocation6 + $0x38] sm:$0xff]
    %v75 = vld [vmem:[#allocation6 + $0x40] sm:$0xff]
    %v76 = vld [vmem:[#allocation6 + $0x48] sm:$0xff]
    %v77 = vld [vmem:[#allocation6 + $0x50] sm:$0xff]
    %v78 = vld [vmem:[#allocation6 + $0x58] sm:$0xff]
    %v79 = vld [vmem:[%s2] sm:$0x1]
    %v81 = vlaneseq
    %v82 = vshrl.u32 %v81, 7
    %v83 = vsub.s32 0, %v82
    %v84 = vrot.slane %v79, %v83
    %vm86 = vcmask 785408
    %v88 = vsel %vm86, %v65, 0
    %v91 = vsel %vm86, %v66, 0
    %93 = vmatprep.subr.mxu0 0.0
    %94 = vmatpush1.msra.mxu0 %v67
    %95 = vmatprep.subr.mxu0 0.0
    %96 = vmatpush1.msra.mxu0 %v68
    %97 = vmatprep.subr.mxu0 0.0
    %98 = vmatpush1.msra.mxu0 %v69
    %99 = vmatprep.subr.mxu0 0.0
    %100 = vmatpush1.msra.mxu0 %v70
    %101 = vmatprep.subr.mxu0 0.0
    %102 = vmatpush1.msra.mxu0 %v71
    %103 = vmatprep.subr.mxu0 0.0
    %104 = vmatpush1.msra.mxu0 %v72
    %105 = vmatprep.subr.mxu0 0.0
    %106 = vmatpush1.msra.mxu0 %v73
    %107 = vmatprep.subr.mxu0 0.0
    %108 = vmatpush1.msra.mxu0 %v74
    %109 = vmatprep.subr.mxu0 0.0
    %110 = vmatpush1.msra.mxu0 %v75
    %111 = vmatprep.subr.mxu0 0.0
    %112 = vmatpush1.msra.mxu0 %v76
    %113 = vmatprep.subr.mxu0 0.0
    %114 = vmatpush1.msra.mxu0 %v77
    %115 = vmatprep.subr.mxu0 0.0
    %116 = vmatpush1.msra.mxu0 %v78
    %117 = vmatprep.subr.mxu0 0.0
    %118 = vmatpush1.msra.mxu0 0.0
    %119 = vmatprep.subr.mxu0 0.0
    %120 = vmatpush1.msra.mxu0 0.0
    %121 = vmatprep.subr.mxu0 0.0
    %122 = vmatpush1.msra.mxu0 0.0
    %123 = vmatprep.subr.mxu0 0.0
    %124 = vmatpush1.msra.mxu0 0.0
    %125 = vmatprep.subr.mxu0 0.0
    %126 = vmatpush1.msra.mxu0 0.0
    %127 = vmatprep.subr.mxu0 0.0
    %128 = vmatpush1.msra.mxu0 0.0
    %129 = vmatprep.subr.mxu0 0.0
    %130 = vmatpush1.msra.mxu0 0.0
    %131 = vmatprep.subr.mxu0 0.0
    %132 = vmatpush1.msra.mxu0 0.0
    %133 = vmatprep.subr.mxu0 0.0
    %134 = vmatpush1.msra.mxu0 0.0
    %135 = vmatprep.subr.mxu0 0.0
    %136 = vmatpush1.msra.mxu0 0.0
    %137 = vmatprep.subr.mxu0 0.0
    %138 = vmatpush1.msra.mxu0 0.0
    %139 = vmatprep.subr.mxu0 0.0
    %140 = vmatpush1.msra.mxu0 0.0
    %141 = vmatprep.subr.mxu0 0.0
    %142 = vmatpush1.msra.mxu0 0.0
    %143 = vmatprep.subr.mxu0 0.0
    %144 = vmatpush1.msra.mxu0 0.0
    %145 = vmatprep.subr.mxu0 0.0
    %146 = vmatpush1.msra.mxu0 0.0
    %147 = vmatprep.subr.mxu0 0.0
    %148 = vmatpush1.msra.mxu0 0.0
    %149 = vmatprep.subr.mxu0 0.0
    %150 = vmatpush1.msra.mxu0 0.0
    %151 = vmatprep.subr.mxu0 0.0
    %152 = vmatpush1.msra.mxu0 0.0
    %153 = vmatprep.subr.mxu0 0.0
    %154 = vmatpush1.msra.mxu0 0.0
    %155 = vmatprep.subr.mxu0 0.0
    %156 = vmatpush1.msra.mxu0 0.0
    %157 = vmatprep.mubr.f32.mxu0 0.0
    %158 = vmatmul.mubr.f32.gmra.mrb[0].mxu0 %v88
    %v159 = vpop.f32.mrb[0].mxu0
    %v160 = vadd.f32 %v84, %v159
    %v161 = vpop.f32.mrb[0].mxu0
    %162 = vmatprep.mubr.f32.mxu0 0.0
    %163 = vmatmul.mubr.f32.gmra.mrb[0].mxu0 %v91
    %v164 = vpop.f32.mrb[0].mxu0
    %v165 = vadd.f32 %v84, %v164
    %v166 = vpop.f32.mrb[0].mxu0
    %167 = vdwg.mxu0
    %169 = vrot.lane.b32.xlu0 %v160, 96
    %v170 = vpop.permute.xlu0 %169
    %vm171 = vcmask 64512
    %v172 = vsel %vm171, %v160, 0
    %v174 = vsel %vm171, %v170, 0
    %176 = vmatprep.subr.mxu0 0.0
    %177 = vmatpush1.xpose.msra.mxu0 %v174
    %178 = vmatprep.subr.mxu0 0.0
    %179 = vmatpush1.xpose.msra.mxu0 0.0
    %180 = vmatprep.subr.mxu0 0.0
    %181 = vmatpush1.xpose.msra.mxu0 0.0
    %182 = vmatprep.subr.mxu0 0.0
    %183 = vmatpush1.xpose.msra.mxu0 0.0
    %184 = vmatprep.subr.mxu0 0.0
    %185 = vmatpush1.xpose.msra.mxu0 0.0
    %186 = vmatprep.subr.mxu0 0.0
    %187 = vmatpush1.xpose.msra.mxu0 0.0
    %188 = vmatprep.subr.mxu0 0.0
    %189 = vmatpush1.xpose.msra.mxu0 0.0
    %190 = vmatprep.subr.mxu0 0.0
    %191 = vmatpush1.xpose.msra.mxu0 0.0
    %192 = vmatprep.subr.mxu0 0.0
    %193 = vmatpush1.xpose.msra.mxu0 0.0
    %194 = vmatprep.subr.mxu0 0.0
    %195 = vmatpush1.xpose.msra.mxu0 0.0
    %196 = vmatprep.subr.mxu0 0.0
    %197 = vmatpush1.xpose.msra.mxu0 0.0
    %198 = vmatprep.subr.mxu0 0.0
    %199 = vmatpush1.xpose.msra.mxu0 0.0
    %200 = vmatprep.subr.mxu0 0.0
    %201 = vmatpush1.xpose.msra.mxu0 0.0
    %202 = vmatprep.subr.mxu0 0.0
    %203 = vmatpush1.xpose.msra.mxu0 0.0
    %204 = vmatprep.subr.mxu0 0.0
    %205 = vmatpush1.xpose.msra.mxu0 0.0
    %206 = vmatprep.subr.mxu0 0.0
    %207 = vmatpush1.xpose.msra.mxu0 0.0
    %208 = vmatprep.subr.mxu0 0.0
    %209 = vmatpush1.xpose.msra.mxu0 0.0
    %210 = vmatprep.subr.mxu0 0.0
    %211 = vmatpush1.xpose.msra.mxu0 0.0
    %212 = vmatprep.subr.mxu0 0.0
    %213 = vmatpush1.xpose.msra.mxu0 0.0
    %214 = vmatprep.subr.mxu0 0.0
    %215 = vmatpush1.xpose.msra.mxu0 0.0
    %216 = vmatprep.subr.mxu0 0.0
    %217 = vmatpush1.xpose.msra.mxu0 0.0
    %218 = vmatprep.subr.mxu0 0.0
    %219 = vmatpush1.xpose.msra.mxu0 0.0
    %220 = vmatprep.subr.mxu0 0.0
    %221 = vmatpush1.xpose.msra.mxu0 0.0
    %222 = vmatprep.subr.mxu0 0.0
    %223 = vmatpush1.xpose.msra.mxu0 0.0
    %224 = vmatprep.subr.mxu0 0.0
    %225 = vmatpush1.xpose.msra.mxu0 0.0
    %226 = vmatprep.subr.mxu0 0.0
    %227 = vmatpush1.xpose.msra.mxu0 0.0
    %228 = vmatprep.subr.mxu0 0.0
    %229 = vmatpush1.xpose.msra.mxu0 0.0
    %230 = vmatprep.subr.mxu0 0.0
    %231 = vmatpush1.xpose.msra.mxu0 0.0
    %232 = vmatprep.subr.mxu0 0.0
    %233 = vmatpush1.xpose.msra.mxu0 0.0
    %234 = vmatprep.subr.mxu0 0.0
    %235 = vmatpush1.xpose.msra.mxu0 0.0
    %236 = vmatprep.subr.mxu0 0.0
    %237 = vmatpush1.xpose.msra.mxu0 0.0
    %238 = vmatprep.subr.mxu0 0.0
    %239 = vmatpush1.xpose.msra.mxu0 0.0
    %240 = vmatprep.mubr.f32.mxu0 0.0
    %241 = vmatmul.mubr.f32.gmra.mrb[0].mxu0 %v172
    %v242 = vpop.f32.mrb[0].mxu0
    %v243 = vadd.f32 0.0, %v242
    %v244 = vpop.f32.mrb[0].mxu0
    %245 = vdwg.mxu0
    %v246 = vmul.f32 %v243, 0.35355338
    %v247 = vsel %vm171, %v246, -inf
    %248 = vmax.xlane.f32.xlu0 %v247
    %v249 = vpop.xlane.xlu0 %248
    %v250 = vsub.f32 %v246, %v249
    %v251 = vmul.f32 %v250, 1.442695
    %v252 = vpow.pop %v251
    %v253 = vsel %vm171, %v252, 0.0
    %254 = vadd.xlane.f32.xlu0 %v253
    %v255 = vpop.xlane.xlu0 %254
    %v256 = vrcp.pop %v255
    %v257 = vmul.f32 1.0, %v256
    %v258 = vmul.f32 %v252, %v257
    %259 = vst.msk [vmem:[#allocation10] sm:$0xff] %vm171, %v258
    %260 = vrot.lane.b32.xlu0 %v160, 64
    %v261 = vpop.permute.xlu0 %260
    %v264 = vsel %vm171, %v258, 0
    %266 = vmatprep.subr.mxu0 0.0
    %267 = vmatpush1.msra.mxu0 %v261
    %268 = vmatprep.subr.mxu0 0.0
    %269 = vmatpush1.msra.mxu0 0.0
    %270 = vmatprep.subr.mxu0 0.0
    %271 = vmatpush1.msra.mxu0 0.0
    %272 = vmatprep.subr.mxu0 0.0
    %273 = vmatpush1.msra.mxu0 0.0
    %274 = vmatprep.subr.mxu0 0.0
    %275 = vmatpush1.msra.mxu0 0.0
    %276 = vmatprep.subr.mxu0 0.0
    %277 = vmatpush1.msra.mxu0 0.0
    %278 = vmatprep.subr.mxu0 0.0
    %279 = vmatpush1.msra.mxu0 0.0
    %280 = vmatprep.subr.mxu0 0.0
    %281 = vmatpush1.msra.mxu0 0.0
    %282 = vmatprep.subr.mxu0 0.0
    %283 = vmatpush1.msra.mxu0 0.0
    %284 = vmatprep.subr.mxu0 0.0
    %285 = vmatpush1.msra.mxu0 0.0
    %286 = vmatprep.subr.mxu0 0.0
    %287 = vmatpush1.msra.mxu0 0.0
    %288 = vmatprep.subr.mxu0 0.0
    %289 = vmatpush1.msra.mxu0 0.0
    %290 = vmatprep.subr.mxu0 0.0
    %291 = vmatpush1.msra.mxu0 0.0
    %292 = vmatprep.subr.mxu0 0.0
    %293 = vmatpush1.msra.mxu0 0.0
    %294 = vmatprep.subr.mxu0 0.0
    %295 = vmatpush1.msra.mxu0 0.0
    %296 = vmatprep.subr.mxu0 0.0
    %297 = vmatpush1.msra.mxu0 0.0
    %298 = vmatprep.subr.mxu0 0.0
    %299 = vmatpush1.msra.mxu0 0.0
    %300 = vmatprep.subr.mxu0 0.0
    %301 = vmatpush1.msra.mxu0 0.0
    %302 = vmatprep.subr.mxu0 0.0
    %303 = vmatpush1.msra.mxu0 0.0
    %304 = vmatprep.subr.mxu0 0.0
    %305 = vmatpush1.msra.mxu0 0.0
    %306 = vmatprep.subr.mxu0 0.0
    %307 = vmatpush1.msra.mxu0 0.0
    %308 = vmatprep.subr.mxu0 0.0
    %309 = vmatpush1.msra.mxu0 0.0
    %310 = vmatprep.subr.mxu0 0.0
    %311 = vmatpush1.msra.mxu0 0.0
    %312 = vmatprep.subr.mxu0 0.0
    %313 = vmatpush1.msra.mxu0 0.0
    %314 = vmatprep.subr.mxu0 0.0
    %315 = vmatpush1.msra.mxu0 0.0
    %316 = vmatprep.subr.mxu0 0.0
    %317 = vmatpush1.msra.mxu0 0.0
    %318 = vmatprep.subr.mxu0 0.0
    %319 = vmatpush1.msra.mxu0 0.0
    %320 = vmatprep.subr.mxu0 0.0
    %321 = vmatpush1.msra.mxu0 0.0
    %322 = vmatprep.subr.mxu0 0.0
    %323 = vmatpush1.msra.mxu0 0.0
    %324 = vmatprep.subr.mxu0 0.0
    %325 = vmatpush1.msra.mxu0 0.0
    %326 = vmatprep.subr.mxu0 0.0
    %327 = vmatpush1.msra.mxu0 0.0
    %328 = vmatprep.subr.mxu0 0.0
    %329 = vmatpush1.msra.mxu0 0.0
    %330 = vmatprep.mubr.f32.mxu0 0.0
    %331 = vmatmul.mubr.f32.gmra.mrb[0].mxu0 %v264
    %v332 = vpop.f32.mrb[0].mxu0
    %v333 = vadd.f32 0.0, %v332
    %v334 = vpop.f32.mrb[0].mxu0
    %335 = vdwg.mxu0
    %336 = vst.msk [vmem:[#allocation2] sm:$0xff] %vm171, %v333
    %337 = vrot.lane.b32.xlu0 %v160, 120
    %v338 = vpop.permute.xlu0 %337
    %339 = vrot.lane.b32.xlu0 %v160, 88
    %v340 = vpop.permute.xlu0 %339
    %v341 = vsel %vm171, %v338, 0
    %v343 = vsel %vm171, %v340, 0
    %345 = vmatprep.subr.mxu0 0.0
    %346 = vmatpush1.xpose.msra.mxu0 %v343
    %347 = vmatprep.subr.mxu0 0.0
    %348 = vmatpush1.xpose.msra.mxu0 0.0
    %349 = vmatprep.subr.mxu0 0.0
    %350 = vmatpush1.xpose.msra.mxu0 0.0
    %351 = vmatprep.subr.mxu0 0.0
    %352 = vmatpush1.xpose.msra.mxu0 0.0
    %353 = vmatprep.subr.mxu0 0.0
    %354 = vmatpush1.xpose.msra.mxu0 0.0
    %355 = vmatprep.subr.mxu0 0.0
    %356 = vmatpush1.xpose.msra.mxu0 0.0
    %357 = vmatprep.subr.mxu0 0.0
    %358 = vmatpush1.xpose.msra.mxu0 0.0
    %359 = vmatprep.subr.mxu0 0.0
    %360 = vmatpush1.xpose.msra.mxu0 0.0
    %361 = vmatprep.subr.mxu0 0.0
    %362 = vmatpush1.xpose.msra.mxu0 0.0
    %363 = vmatprep.subr.mxu0 0.0
    %364 = vmatpush1.xpose.msra.mxu0 0.0
    %365 = vmatprep.subr.mxu0 0.0
    %366 = vmatpush1.xpose.msra.mxu0 0.0
    %367 = vmatprep.subr.mxu0 0.0
    %368 = vmatpush1.xpose.msra.mxu0 0.0
    %369 = vmatprep.subr.mxu0 0.0
    %370 = vmatpush1.xpose.msra.mxu0 0.0
    %371 = vmatprep.subr.mxu0 0.0
    %372 = vmatpush1.xpose.msra.mxu0 0.0
    %373 = vmatprep.subr.mxu0 0.0
    %374 = vmatpush1.xpose.msra.mxu0 0.0
    %375 = vmatprep.subr.mxu0 0.0
    %376 = vmatpush1.xpose.msra.mxu0 0.0
    %377 = vmatprep.subr.mxu0 0.0
    %378 = vmatpush1.xpose.msra.mxu0 0.0
    %379 = vmatprep.subr.mxu0 0.0
    %380 = vmatpush1.xpose.msra.mxu0 0.0
    %381 = vmatprep.subr.mxu0 0.0
    %382 = vmatpush1.xpose.msra.mxu0 0.0
    %383 = vmatprep.subr.mxu0 0.0
    %384 = vmatpush1.xpose.msra.mxu0 0.0
    %385 = vmatprep.subr.mxu0 0.0
    %386 = vmatpush1.xpose.msra.mxu0 0.0
    %387 = vmatprep.subr.mxu0 0.0
    %388 = vmatpush1.xpose.msra.mxu0 0.0
    %389 = vmatprep.subr.mxu0 0.0
    %390 = vmatpush1.xpose.msra.mxu0 0.0
    %391 = vmatprep.subr.mxu0 0.0
    %392 = vmatpush1.xpose.msra.mxu0 0.0
    %393 = vmatprep.subr.mxu0 0.0
    %394 = vmatpush1.xpose.msra.mxu0 0.0
    %395 = vmatprep.subr.mxu0 0.0
    %396 = vmatpush1.xpose.msra.mxu0 0.0
    %397 = vmatprep.subr.mxu0 0.0
    %398 = vmatpush1.xpose.msra.mxu0 0.0
    %399 = vmatprep.subr.mxu0 0.0
    %400 = vmatpush1.xpose.msra.mxu0 0.0
    %401 = vmatprep.subr.mxu0 0.0
    %402 = vmatpush1.xpose.msra.mxu0 0.0
    %403 = vmatprep.subr.mxu0 0.0
    %404 = vmatpush1.xpose.msra.mxu0 0.0
    %405 = vmatprep.subr.mxu0 0.0
    %406 = vmatpush1.xpose.msra.mxu0 0.0
    %407 = vmatprep.subr.mxu0 0.0
    %408 = vmatpush1.xpose.msra.mxu0 0.0
    %409 = vmatprep.mubr.f32.mxu0 0.0
    %410 = vmatmul.mubr.f32.gmra.mrb[0].mxu0 %v341
    %v411 = vpop.f32.mrb[0].mxu0
    %v412 = vadd.f32 0.0, %v411
    %v413 = vpop.f32.mrb[0].mxu0
    %414 = vdwg.mxu0
    %v415 = vmul.f32 %v412, 0.35355338
    %v416 = vsel %vm171, %v415, -inf
    %417 = vmax.xlane.f32.xlu0 %v416
    %v418 = vpop.xlane.xlu0 %417
    %v419 = vsub.f32 %v415, %v418
    %v420 = vmul.f32 %v419, 1.442695
    %v421 = vpow.pop %v420
    %v422 = vsel %vm171, %v421, 0.0
    %423 = vadd.xlane.f32.xlu0 %v422
    %v424 = vpop.xlane.xlu0 %423
    %v425 = vrcp.pop %v424
    %v426 = vmul.f32 1.0, %v425
    %v427 = vmul.f32 %v421, %v426
    %429 = vrot.lane.b32.xlu0 %v427, 8
    %v430 = vpop.permute.xlu0 %429
    %vm432 = vcmask 130112
    %433 = vst.msk [vmem:[#allocation10] sm:$0xff] %vm432, %v430
    %434 = vrot.lane.b32.xlu0 %v160, 56
    %v435 = vpop.permute.xlu0 %434
    %v437 = vsel %vm171, %v427, 0
    %439 = vmatprep.subr.mxu0 0.0
    %440 = vmatpush1.msra.mxu0 %v435
    %441 = vmatprep.subr.mxu0 0.0
    %442 = vmatpush1.msra.mxu0 0.0
    %443 = vmatprep.subr.mxu0 0.0
    %444 = vmatpush1.msra.mxu0 0.0
    %445 = vmatprep.subr.mxu0 0.0
    %446 = vmatpush1.msra.mxu0 0.0
    %447 = vmatprep.subr.mxu0 0.0
    %448 = vmatpush1.msra.mxu0 0.0
    %449 = vmatprep.subr.mxu0 0.0
    %450 = vmatpush1.msra.mxu0 0.0
    %451 = vmatprep.subr.mxu0 0.0
    %452 = vmatpush1.msra.mxu0 0.0
    %453 = vmatprep.subr.mxu0 0.0
    %454 = vmatpush1.msra.mxu0 0.0
    %455 = vmatprep.subr.mxu0 0.0
    %456 = vmatpush1.msra.mxu0 0.0
    %457 = vmatprep.subr.mxu0 0.0
    %458 = vmatpush1.msra.mxu0 0.0
    %459 = vmatprep.subr.mxu0 0.0
    %460 = vmatpush1.msra.mxu0 0.0
    %461 = vmatprep.subr.mxu0 0.0
    %462 = vmatpush1.msra.mxu0 0.0
    %463 = vmatprep.subr.mxu0 0.0
    %464 = vmatpush1.msra.mxu0 0.0
    %465 = vmatprep.subr.mxu0 0.0
    %466 = vmatpush1.msra.mxu0 0.0
    %467 = vmatprep.subr.mxu0 0.0
    %468 = vmatpush1.msra.mxu0 0.0
    %469 = vmatprep.subr.mxu0 0.0
    %470 = vmatpush1.msra.mxu0 0.0
    %471 = vmatprep.subr.mxu0 0.0
    %472 = vmatpush1.msra.mxu0 0.0
    %473 = vmatprep.subr.mxu0 0.0
    %474 = vmatpush1.msra.mxu0 0.0
    %475 = vmatprep.subr.mxu0 0.0
    %476 = vmatpush1.msra.mxu0 0.0
    %477 = vmatprep.subr.mxu0 0.0
    %478 = vmatpush1.msra.mxu0 0.0
    %479 = vmatprep.subr.mxu0 0.0
    %480 = vmatpush1.msra.mxu0 0.0
    %481 = vmatprep.subr.mxu0 0.0
    %482 = vmatpush1.msra.mxu0 0.0
    %483 = vmatprep.subr.mxu0 0.0
    %484 = vmatpush1.msra.mxu0 0.0
    %485 = vmatprep.subr.mxu0 0.0
    %486 = vmatpush1.msra.mxu0 0.0
    %487 = vmatprep.subr.mxu0 0.0
    %488 = vmatpush1.msra.mxu0 0.0
    %489 = vmatprep.subr.mxu0 0.0
    %490 = vmatpush1.msra.mxu0 0.0
    %491 = vmatprep.subr.mxu0 0.0
    %492 = vmatpush1.msra.mxu0 0.0
    %493 = vmatprep.subr.mxu0 0.0
    %494 = vmatpush1.msra.mxu0 0.0
    %495 = vmatprep.subr.mxu0 0.0
    %496 = vmatpush1.msra.mxu0 0.0
    %497 = vmatprep.subr.mxu0 0.0
    %498 = vmatpush1.msra.mxu0 0.0
    %499 = vmatprep.subr.mxu0 0.0
    %500 = vmatpush1.msra.mxu0 0.0
    %501 = vmatprep.subr.mxu0 0.0
    %502 = vmatpush1.msra.mxu0 0.0
    %503 = vmatprep.mubr.f32.mxu0 0.0
    %504 = vmatmul.mubr.f32.gmra.mrb[0].mxu0 %v437
    %v505 = vpop.f32.mrb[0].mxu0
    %v506 = vadd.f32 0.0, %v505
    %v507 = vpop.f32.mrb[0].mxu0
    %508 = vdwg.mxu0
    %510 = vrot.lane.b32.xlu0 %v506, 8
    %v511 = vpop.permute.xlu0 %510
    %513 = vst.msk [vmem:[#allocation2] sm:$0xff] %vm432, %v511
    %514 = vrot.lane.b32.xlu0 %v160, 112
    %v515 = vpop.permute.xlu0 %514
    %516 = vrot.lane.b32.xlu0 %v160, 80
    %v517 = vpop.permute.xlu0 %516
    %v518 = vsel %vm171, %v515, 0
    %v520 = vsel %vm171, %v517, 0
    %522 = vmatprep.subr.mxu0 0.0
    %523 = vmatpush1.xpose.msra.mxu0 %v520
    %524 = vmatprep.subr.mxu0 0.0
    %525 = vmatpush1.xpose.msra.mxu0 0.0
    %526 = vmatprep.subr.mxu0 0.0
    %527 = vmatpush1.xpose.msra.mxu0 0.0
    %528 = vmatprep.subr.mxu0 0.0
    %529 = vmatpush1.xpose.msra.mxu0 0.0
    %530 = vmatprep.subr.mxu0 0.0
    %531 = vmatpush1.xpose.msra.mxu0 0.0
    %532 = vmatprep.subr.mxu0 0.0
    %533 = vmatpush1.xpose.msra.mxu0 0.0
    %534 = vmatprep.subr.mxu0 0.0
    %535 = vmatpush1.xpose.msra.mxu0 0.0
    %536 = vmatprep.subr.mxu0 0.0
    %537 = vmatpush1.xpose.msra.mxu0 0.0
    %538 = vmatprep.subr.mxu0 0.0
    %539 = vmatpush1.xpose.msra.mxu0 0.0
    %540 = vmatprep.subr.mxu0 0.0
    %541 = vmatpush1.xpose.msra.mxu0 0.0
    %542 = vmatprep.subr.mxu0 0.0
    %543 = vmatpush1.xpose.msra.mxu0 0.0
    %544 = vmatprep.subr.mxu0 0.0
    %545 = vmatpush1.xpose.msra.mxu0 0.0
    %546 = vmatprep.subr.mxu0 0.0
    %547 = vmatpush1.xpose.msra.mxu0 0.0
    %548 = vmatprep.subr.mxu0 0.0
    %549 = vmatpush1.xpose.msra.mxu0 0.0
    %550 = vmatprep.subr.mxu0 0.0
    %551 = vmatpush1.xpose.msra.mxu0 0.0
    %552 = vmatprep.subr.mxu0 0.0
    %553 = vmatpush1.xpose.msra.mxu0 0.0
    %554 = vmatprep.subr.mxu0 0.0
    %555 = vmatpush1.xpose.msra.mxu0 0.0
    %556 = vmatprep.subr.mxu0 0.0
    %557 = vmatpush1.xpose.msra.mxu0 0.0
    %558 = vmatprep.subr.mxu0 0.0
    %559 = vmatpush1.xpose.msra.mxu0 0.0
    %560 = vmatprep.subr.mxu0 0.0
    %561 = vmatpush1.xpose.msra.mxu0 0.0
    %562 = vmatprep.subr.mxu0 0.0
    %563 = vmatpush1.xpose.msra.mxu0 0.0
    %564 = vmatprep.subr.mxu0 0.0
    %565 = vmatpush1.xpose.msra.mxu0 0.0
    %566 = vmatprep.subr.mxu0 0.0
    %567 = vmatpush1.xpose.msra.mxu0 0.0
    %568 = vmatprep.subr.mxu0 0.0
    %569 = vmatpush1.xpose.msra.mxu0 0.0
    %570 = vmatprep.subr.mxu0 0.0
    %571 = vmatpush1.xpose.msra.mxu0 0.0
    %572 = vmatprep.subr.mxu0 0.0
    %573 = vmatpush1.xpose.msra.mxu0 0.0
    %574 = vmatprep.subr.mxu0 0.0
    %575 = vmatpush1.xpose.msra.mxu0 0.0
    %576 = vmatprep.subr.mxu0 0.0
    %577 = vmatpush1.xpose.msra.mxu0 0.0
    %578 = vmatprep.subr.mxu0 0.0
    %579 = vmatpush1.xpose.msra.mxu0 0.0
    %580 = vmatprep.subr.mxu0 0.0
    %581 = vmatpush1.xpose.msra.mxu0 0.0
    %582 = vmatprep.subr.mxu0 0.0
    %583 = vmatpush1.xpose.msra.mxu0 0.0
    %584 = vmatprep.subr.mxu0 0.0
    %585 = vmatpush1.xpose.msra.mxu0 0.0
    %586 = vmatprep.mubr.f32.mxu0 0.0
    %587 = vmatmul.mubr.f32.gmra.mrb[0].mxu0 %v518
    %v588 = vpop.f32.mrb[0].mxu0
    %v589 = vadd.f32 0.0, %v588
    %v590 = vpop.f32.mrb[0].mxu0
    %591 = vdwg.mxu0
    %v592 = vmul.f32 %v589, 0.35355338
    %v593 = vsel %vm171, %v592, -inf
    %594 = vmax.xlane.f32.xlu0 %v593
    %v595 = vpop.xlane.xlu0 %594
    %v596 = vsub.f32 %v592, %v595
    %v597 = vmul.f32 %v596, 1.442695
    %v598 = vpow.pop %v597
    %v599 = vsel %vm171, %v598, 0.0
    %600 = vadd.xlane.f32.xlu0 %v599
    %v601 = vpop.xlane.xlu0 %600
    %v602 = vrcp.pop %v601
    %v603 = vmul.f32 1.0, %v602
    %v604 = vmul.f32 %v598, %v603
    %606 = vrot.lane.b32.xlu0 %v604, 16
    %v607 = vpop.permute.xlu0 %606
    %vm609 = vcmask 195712
    %610 = vst.msk [vmem:[#allocation10] sm:$0xff] %vm609, %v607
    %611 = vrot.lane.b32.xlu0 %v160, 48
    %v612 = vpop.permute.xlu0 %611
    %v614 = vsel %vm171, %v604, 0
    %616 = vmatprep.subr.mxu0 0.0
    %617 = vmatpush1.msra.mxu0 %v612
    %618 = vmatprep.subr.mxu0 0.0
    %619 = vmatpush1.msra.mxu0 0.0
    %620 = vmatprep.subr.mxu0 0.0
    %621 = vmatpush1.msra.mxu0 0.0
    %622 = vmatprep.subr.mxu0 0.0
    %623 = vmatpush1.msra.mxu0 0.0
    %624 = vmatprep.subr.mxu0 0.0
    %625 = vmatpush1.msra.mxu0 0.0
    %626 = vmatprep.subr.mxu0 0.0
    %627 = vmatpush1.msra.mxu0 0.0
    %628 = vmatprep.subr.mxu0 0.0
    %629 = vmatpush1.msra.mxu0 0.0
    %630 = vmatprep.subr.mxu0 0.0
    %631 = vmatpush1.msra.mxu0 0.0
    %632 = vmatprep.subr.mxu0 0.0
    %633 = vmatpush1.msra.mxu0 0.0
    %634 = vmatprep.subr.mxu0 0.0
    %635 = vmatpush1.msra.mxu0 0.0
    %636 = vmatprep.subr.mxu0 0.0
    %637 = vmatpush1.msra.mxu0 0.0
    %638 = vmatprep.subr.mxu0 0.0
    %639 = vmatpush1.msra.mxu0 0.0
    %640 = vmatprep.subr.mxu0 0.0
    %641 = vmatpush1.msra.mxu0 0.0
    %642 = vmatprep.subr.mxu0 0.0
    %643 = vmatpush1.msra.mxu0 0.0
    %644 = vmatprep.subr.mxu0 0.0
    %645 = vmatpush1.msra.mxu0 0.0
    %646 = vmatprep.subr.mxu0 0.0
    %647 = vmatpush1.msra.mxu0 0.0
    %648 = vmatprep.subr.mxu0 0.0
    %649 = vmatpush1.msra.mxu0 0.0
    %650 = vmatprep.subr.mxu0 0.0
    %651 = vmatpush1.msra.mxu0 0.0
    %652 = vmatprep.subr.mxu0 0.0
    %653 = vmatpush1.msra.mxu0 0.0
    %654 = vmatprep.subr.mxu0 0.0
    %655 = vmatpush1.msra.mxu0 0.0
    %656 = vmatprep.subr.mxu0 0.0
    %657 = vmatpush1.msra.mxu0 0.0
    %658 = vmatprep.subr.mxu0 0.0
    %659 = vmatpush1.msra.mxu0 0.0
    %660 = vmatprep.subr.mxu0 0.0
    %661 = vmatpush1.msra.mxu0 0.0
    %662 = vmatprep.subr.mxu0 0.0
    %663 = vmatpush1.msra.mxu0 0.0
    %664 = vmatprep.subr.mxu0 0.0
    %665 = vmatpush1.msra.mxu0 0.0
    %666 = vmatprep.subr.mxu0 0.0
    %667 = vmatpush1.msra.mxu0 0.0
    %668 = vmatprep.subr.mxu0 0.0
    %669 = vmatpush1.msra.mxu0 0.0
    %670 = vmatprep.subr.mxu0 0.0
    %671 = vmatpush1.msra.mxu0 0.0
    %672 = vmatprep.subr.mxu0 0.0
    %673 = vmatpush1.msra.mxu0 0.0
    %674 = vmatprep.subr.mxu0 0.0
    %675 = vmatpush1.msra.mxu0 0.0
    %676 = vmatprep.subr.mxu0 0.0
    %677 = vmatpush1.msra.mxu0 0.0
    %678 = vmatprep.subr.mxu0 0.0
    %679 = vmatpush1.msra.mxu0 0.0
    %680 = vmatprep.mubr.f32.mxu0 0.0
    %681 = vmatmul.mubr.f32.gmra.mrb[0].mxu0 %v614
    %v682 = vpop.f32.mrb[0].mxu0
    %v683 = vadd.f32 0.0, %v682
    %v684 = vpop.f32.mrb[0].mxu0
    %685 = vdwg.mxu0
    %687 = vrot.lane.b32.xlu0 %v683, 16
    %v688 = vpop.permute.xlu0 %687
    %690 = vst.msk [vmem:[#allocation2] sm:$0xff] %vm609, %v688
    %691 = vrot.lane.b32.xlu0 %v160, 104
    %v692 = vpop.permute.xlu0 %691
    %693 = vrot.lane.b32.xlu0 %v160, 72
    %v694 = vpop.permute.xlu0 %693
    %v695 = vsel %vm171, %v692, 0
    %v697 = vsel %vm171, %v694, 0
    %699 = vmatprep.subr.mxu0 0.0
    %700 = vmatpush1.xpose.msra.mxu0 %v697
    %701 = vmatprep.subr.mxu0 0.0
    %702 = vmatpush1.xpose.msra.mxu0 0.0
    %703 = vmatprep.subr.mxu0 0.0
    %704 = vmatpush1.xpose.msra.mxu0 0.0
    %705 = vmatprep.subr.mxu0 0.0
    %706 = vmatpush1.xpose.msra.mxu0 0.0
    %707 = vmatprep.subr.mxu0 0.0
    %708 = vmatpush1.xpose.msra.mxu0 0.0
    %709 = vmatprep.subr.mxu0 0.0
    %710 = vmatpush1.xpose.msra.mxu0 0.0
    %711 = vmatprep.subr.mxu0 0.0
    %712 = vmatpush1.xpose.msra.mxu0 0.0
    %713 = vmatprep.subr.mxu0 0.0
    %714 = vmatpush1.xpose.msra.mxu0 0.0
    %715 = vmatprep.subr.mxu0 0.0
    %716 = vmatpush1.xpose.msra.mxu0 0.0
    %717 = vmatprep.subr.mxu0 0.0
    %718 = vmatpush1.xpose.msra.mxu0 0.0
    %719 = vmatprep.subr.mxu0 0.0
    %720 = vmatpush1.xpose.msra.mxu0 0.0
    %721 = vmatprep.subr.mxu0 0.0
    %722 = vmatpush1.xpose.msra.mxu0 0.0
    %723 = vmatprep.subr.mxu0 0.0
    %724 = vmatpush1.xpose.msra.mxu0 0.0
    %725 = vmatprep.subr.mxu0 0.0
    %726 = vmatpush1.xpose.msra.mxu0 0.0
    %727 = vmatprep.subr.mxu0 0.0
    %728 = vmatpush1.xpose.msra.mxu0 0.0
    %729 = vmatprep.subr.mxu0 0.0
    %730 = vmatpush1.xpose.msra.mxu0 0.0
    %731 = vmatprep.subr.mxu0 0.0
    %732 = vmatpush1.xpose.msra.mxu0 0.0
    %733 = vmatprep.subr.mxu0 0.0
    %734 = vmatpush1.xpose.msra.mxu0 0.0
    %735 = vmatprep.subr.mxu0 0.0
    %736 = vmatpush1.xpose.msra.mxu0 0.0
    %737 = vmatprep.subr.mxu0 0.0
    %738 = vmatpush1.xpose.msra.mxu0 0.0
    %739 = vmatprep.subr.mxu0 0.0
    %740 = vmatpush1.xpose.msra.mxu0 0.0
    %741 = vmatprep.subr.mxu0 0.0
    %742 = vmatpush1.xpose.msra.mxu0 0.0
    %743 = vmatprep.subr.mxu0 0.0
    %744 = vmatpush1.xpose.msra.mxu0 0.0
    %745 = vmatprep.subr.mxu0 0.0
    %746 = vmatpush1.xpose.msra.mxu0 0.0
    %747 = vmatprep.subr.mxu0 0.0
    %748 = vmatpush1.xpose.msra.mxu0 0.0
    %749 = vmatprep.subr.mxu0 0.0
    %750 = vmatpush1.xpose.msra.mxu0 0.0
    %751 = vmatprep.subr.mxu0 0.0
    %752 = vmatpush1.xpose.msra.mxu0 0.0
    %753 = vmatprep.subr.mxu0 0.0
    %754 = vmatpush1.xpose.msra.mxu0 0.0
    %755 = vmatprep.subr.mxu0 0.0
    %756 = vmatpush1.xpose.msra.mxu0 0.0
    %757 = vmatprep.subr.mxu0 0.0
    %758 = vmatpush1.xpose.msra.mxu0 0.0
    %759 = vmatprep.subr.mxu0 0.0
    %760 = vmatpush1.xpose.msra.mxu0 0.0
    %761 = vmatprep.subr.mxu0 0.0
    %762 = vmatpush1.xpose.msra.mxu0 0.0
    %763 = vmatprep.mubr.f32.mxu0 0.0
    %764 = vmatmul.mubr.f32.gmra.mrb[0].mxu0 %v695
    %v765 = vpop.f32.mrb[0].mxu0
    %v766 = vadd.f32 0.0, %v765
    %v767 = vpop.f32.mrb[0].mxu0
    %768 = vdwg.mxu0
    %v769 = vmul.f32 %v766, 0.35355338
    %v770 = vsel %vm171, %v769, -inf
    %771 = vmax.xlane.f32.xlu0 %v770
    %v772 = vpop.xlane.xlu0 %771
    %v773 = vsub.f32 %v769, %v772
    %v774 = vmul.f32 %v773, 1.442695
    %v775 = vpow.pop %v774
    %v776 = vsel %vm171, %v775, 0.0
    %777 = vadd.xlane.f32.xlu0 %v776
    %v778 = vpop.xlane.xlu0 %777
    %v779 = vrcp.pop %v778
    %v780 = vmul.f32 1.0, %v779
    %v781 = vmul.f32 %v775, %v780
    %783 = vrot.lane.b32.xlu0 %v781, 24
    %v784 = vpop.permute.xlu0 %783
    %vm786 = vcmask 261312
    %787 = vst.msk [vmem:[#allocation10] sm:$0xff] %vm786, %v784
    %788 = vrot.lane.b32.xlu0 %v160, 40
    %v789 = vpop.permute.xlu0 %788
    %v791 = vsel %vm171, %v781, 0
    %793 = vmatprep.subr.mxu0 0.0
    %794 = vmatpush1.msra.mxu0 %v789
    %795 = vmatprep.subr.mxu0 0.0
    %796 = vmatpush1.msra.mxu0 0.0
    %797 = vmatprep.subr.mxu0 0.0
    %798 = vmatpush1.msra.mxu0 0.0
    %799 = vmatprep.subr.mxu0 0.0
    %800 = vmatpush1.msra.mxu0 0.0
    %801 = vmatprep.subr.mxu0 0.0
    %802 = vmatpush1.msra.mxu0 0.0
    %803 = vmatprep.subr.mxu0 0.0
    %804 = vmatpush1.msra.mxu0 0.0
    %805 = vmatprep.subr.mxu0 0.0
    %806 = vmatpush1.msra.mxu0 0.0
    %807 = vmatprep.subr.mxu0 0.0
    %808 = vmatpush1.msra.mxu0 0.0
    %809 = vmatprep.subr.mxu0 0.0
    %810 = vmatpush1.msra.mxu0 0.0
    %811 = vmatprep.subr.mxu0 0.0
    %812 = vmatpush1.msra.mxu0 0.0
    %813 = vmatprep.subr.mxu0 0.0
    %814 = vmatpush1.msra.mxu0 0.0
    %815 = vmatprep.subr.mxu0 0.0
    %816 = vmatpush1.msra.mxu0 0.0
    %817 = vmatprep.subr.mxu0 0.0
    %818 = vmatpush1.msra.mxu0 0.0
    %819 = vmatprep.subr.mxu0 0.0
    %820 = vmatpush1.msra.mxu0 0.0
    %821 = vmatprep.subr.mxu0 0.0
    %822 = vmatpush1.msra.mxu0 0.0
    %823 = vmatprep.subr.mxu0 0.0
    %824 = vmatpush1.msra.mxu0 0.0
    %825 = vmatprep.subr.mxu0 0.0
    %826 = vmatpush1.msra.mxu0 0.0
    %827 = vmatprep.subr.mxu0 0.0
    %828 = vmatpush1.msra.mxu0 0.0
    %829 = vmatprep.subr.mxu0 0.0
    %830 = vmatpush1.msra.mxu0 0.0
    %831 = vmatprep.subr.mxu0 0.0
    %832 = vmatpush1.msra.mxu0 0.0
    %833 = vmatprep.subr.mxu0 0.0
    %834 = vmatpush1.msra.mxu0 0.0
    %835 = vmatprep.subr.mxu0 0.0
    %836 = vmatpush1.msra.mxu0 0.0
    %837 = vmatprep.subr.mxu0 0.0
    %838 = vmatpush1.msra.mxu0 0.0
    %839 = vmatprep.subr.mxu0 0.0
    %840 = vmatpush1.msra.mxu0 0.0
    %841 = vmatprep.subr.mxu0 0.0
    %842 = vmatpush1.msra.mxu0 0.0
    %843 = vmatprep.subr.mxu0 0.0
    %844 = vmatpush1.msra.mxu0 0.0
    %845 = vmatprep.subr.mxu0 0.0
    %846 = vmatpush1.msra.mxu0 0.0
    %847 = vmatprep.subr.mxu0 0.0
    %848 = vmatpush1.msra.mxu0 0.0
    %849 = vmatprep.subr.mxu0 0.0
    %850 = vmatpush1.msra.mxu0 0.0
    %851 = vmatprep.subr.mxu0 0.0
    %852 = vmatpush1.msra.mxu0 0.0
    %853 = vmatprep.subr.mxu0 0.0
    %854 = vmatpush1.msra.mxu0 0.0
    %855 = vmatprep.subr.mxu0 0.0
    %856 = vmatpush1.msra.mxu0 0.0
    %857 = vmatprep.mubr.f32.mxu0 0.0
    %858 = vmatmul.mubr.f32.gmra.mrb[0].mxu0 %v791
    %v859 = vpop.f32.mrb[0].mxu0
    %v860 = vadd.f32 0.0, %v859
    %v861 = vpop.f32.mrb[0].mxu0
    %862 = vdwg.mxu0
    %864 = vrot.lane.b32.xlu0 %v860, 24
    %v865 = vpop.permute.xlu0 %864
    %867 = vst.msk [vmem:[#allocation2] sm:$0xff] %vm786, %v865
    %869 = vrot.lane.b32.xlu0 %v165, 96
    %v870 = vpop.permute.xlu0 %869
    %v871 = vsel %vm171, %v165, 0
    %v873 = vsel %vm171, %v870, 0
    %875 = vmatprep.subr.mxu0 0.0
    %876 = vmatpush1.xpose.msra.mxu0 %v873
    %877 = vmatprep.subr.mxu0 0.0
    %878 = vmatpush1.xpose.msra.mxu0 0.0
    %879 = vmatprep.subr.mxu0 0.0
    %880 = vmatpush1.xpose.msra.mxu0 0.0
    %881 = vmatprep.subr.mxu0 0.0
    %882 = vmatpush1.xpose.msra.mxu0 0.0
    %883 = vmatprep.subr.mxu0 0.0
    %884 = vmatpush1.xpose.msra.mxu0 0.0
    %885 = vmatprep.subr.mxu0 0.0
    %886 = vmatpush1.xpose.msra.mxu0 0.0
    %887 = vmatprep.subr.mxu0 0.0
    %888 = vmatpush1.xpose.msra.mxu0 0.0
    %889 = vmatprep.subr.mxu0 0.0
    %890 = vmatpush1.xpose.msra.mxu0 0.0
    %891 = vmatprep.subr.mxu0 0.0
    %892 = vmatpush1.xpose.msra.mxu0 0.0
    %893 = vmatprep.subr.mxu0 0.0
    %894 = vmatpush1.xpose.msra.mxu0 0.0
    %895 = vmatprep.subr.mxu0 0.0
    %896 = vmatpush1.xpose.msra.mxu0 0.0
    %897 = vmatprep.subr.mxu0 0.0
    %898 = vmatpush1.xpose.msra.mxu0 0.0
    %899 = vmatprep.subr.mxu0 0.0
    %900 = vmatpush1.xpose.msra.mxu0 0.0
    %901 = vmatprep.subr.mxu0 0.0
    %902 = vmatpush1.xpose.msra.mxu0 0.0
    %903 = vmatprep.subr.mxu0 0.0
    %904 = vmatpush1.xpose.msra.mxu0 0.0
    %905 = vmatprep.subr.mxu0 0.0
    %906 = vmatpush1.xpose.msra.mxu0 0.0
    %907 = vmatprep.subr.mxu0 0.0
    %908 = vmatpush1.xpose.msra.mxu0 0.0
    %909 = vmatprep.subr.mxu0 0.0
    %910 = vmatpush1.xpose.msra.mxu0 0.0
    %911 = vmatprep.subr.mxu0 0.0
    %912 = vmatpush1.xpose.msra.mxu0 0.0
    %913 = vmatprep.subr.mxu0 0.0
    %914 = vmatpush1.xpose.msra.mxu0 0.0
    %915 = vmatprep.subr.mxu0 0.0
    %916 = vmatpush1.xpose.msra.mxu0 0.0
    %917 = vmatprep.subr.mxu0 0.0
    %918 = vmatpush1.xpose.msra.mxu0 0.0
    %919 = vmatprep.subr.mxu0 0.0
    %920 = vmatpush1.xpose.msra.mxu0 0.0
    %921 = vmatprep.subr.mxu0 0.0
    %922 = vmatpush1.xpose.msra.mxu0 0.0
    %923 = vmatprep.subr.mxu0 0.0
    %924 = vmatpush1.xpose.msra.mxu0 0.0
    %925 = vmatprep.subr.mxu0 0.0
    %926 = vmatpush1.xpose.msra.mxu0 0.0
    %927 = vmatprep.subr.mxu0 0.0
    %928 = vmatpush1.xpose.msra.mxu0 0.0
    %929 = vmatprep.subr.mxu0 0.0
    %930 = vmatpush1.xpose.msra.mxu0 0.0
    %931 = vmatprep.subr.mxu0 0.0
    %932 = vmatpush1.xpose.msra.mxu0 0.0
    %933 = vmatprep.subr.mxu0 0.0
    %934 = vmatpush1.xpose.msra.mxu0 0.0
    %935 = vmatprep.subr.mxu0 0.0
    %936 = vmatpush1.xpose.msra.mxu0 0.0
    %937 = vmatprep.subr.mxu0 0.0
    %938 = vmatpush1.xpose.msra.mxu0 0.0
    %939 = vmatprep.mubr.f32.mxu0 0.0
    %940 = vmatmul.mubr.f32.gmra.mrb[0].mxu0 %v871
    %v941 = vpop.f32.mrb[0].mxu0
    %v942 = vadd.f32 0.0, %v941
    %v943 = vpop.f32.mrb[0].mxu0
    %944 = vdwg.mxu0
    %v945 = vmul.f32 %v942, 0.35355338
    %v946 = vsel %vm171, %v945, -inf
    %947 = vmax.xlane.f32.xlu0 %v946
    %v948 = vpop.xlane.xlu0 %947
    %v949 = vsub.f32 %v945, %v948
    %v950 = vmul.f32 %v949, 1.442695
    %v951 = vpow.pop %v950
    %v952 = vsel %vm171, %v951, 0.0
    %953 = vadd.xlane.f32.xlu0 %v952
    %v954 = vpop.xlane.xlu0 %953
    %v955 = vrcp.pop %v954
    %v956 = vmul.f32 1.0, %v955
    %v957 = vmul.f32 %v951, %v956
    %958 = vst.msk [vmem:[#allocation10 + $0x8] sm:$0xff] %vm171, %v957
    %959 = vrot.lane.b32.xlu0 %v165, 64
    %v960 = vpop.permute.xlu0 %959
    %v963 = vsel %vm171, %v957, 0
    %965 = vmatprep.subr.mxu0 0.0
    %966 = vmatpush1.msra.mxu0 %v960
    %967 = vmatprep.subr.mxu0 0.0
    %968 = vmatpush1.msra.mxu0 0.0
    %969 = vmatprep.subr.mxu0 0.0
    %970 = vmatpush1.msra.mxu0 0.0
    %971 = vmatprep.subr.mxu0 0.0
    %972 = vmatpush1.msra.mxu0 0.0
    %973 = vmatprep.subr.mxu0 0.0
    %974 = vmatpush1.msra.mxu0 0.0
    %975 = vmatprep.subr.mxu0 0.0
    %976 = vmatpush1.msra.mxu0 0.0
    %977 = vmatprep.subr.mxu0 0.0
    %978 = vmatpush1.msra.mxu0 0.0
    %979 = vmatprep.subr.mxu0 0.0
    %980 = vmatpush1.msra.mxu0 0.0
    %981 = vmatprep.subr.mxu0 0.0
    %982 = vmatpush1.msra.mxu0 0.0
    %983 = vmatprep.subr.mxu0 0.0
    %984 = vmatpush1.msra.mxu0 0.0
    %985 = vmatprep.subr.mxu0 0.0
    %986 = vmatpush1.msra.mxu0 0.0
    %987 = vmatprep.subr.mxu0 0.0
    %988 = vmatpush1.msra.mxu0 0.0
    %989 = vmatprep.subr.mxu0 0.0
    %990 = vmatpush1.msra.mxu0 0.0
    %991 = vmatprep.subr.mxu0 0.0
    %992 = vmatpush1.msra.mxu0 0.0
    %993 = vmatprep.subr.mxu0 0.0
    %994 = vmatpush1.msra.mxu0 0.0
    %995 = vmatprep.subr.mxu0 0.0
    %996 = vmatpush1.msra.mxu0 0.0
    %997 = vmatprep.subr.mxu0 0.0
    %998 = vmatpush1.msra.mxu0 0.0
    %999 = vmatprep.subr.mxu0 0.0
    %1000 = vmatpush1.msra.mxu0 0.0
    %1001 = vmatprep.subr.mxu0 0.0
    %1002 = vmatpush1.msra.mxu0 0.0
    %1003 = vmatprep.subr.mxu0 0.0
    %1004 = vmatpush1.msra.mxu0 0.0
    %1005 = vmatprep.subr.mxu0 0.0
    %1006 = vmatpush1.msra.mxu0 0.0
    %1007 = vmatprep.subr.mxu0 0.0
    %1008 = vmatpush1.msra.mxu0 0.0
    %1009 = vmatprep.subr.mxu0 0.0
    %1010 = vmatpush1.msra.mxu0 0.0
    %1011 = vmatprep.subr.mxu0 0.0
    %1012 = vmatpush1.msra.mxu0 0.0
    %1013 = vmatprep.subr.mxu0 0.0
    %1014 = vmatpush1.msra.mxu0 0.0
    %1015 = vmatprep.subr.mxu0 0.0
    %1016 = vmatpush1.msra.mxu0 0.0
    %1017 = vmatprep.subr.mxu0 0.0
    %1018 = vmatpush1.msra.mxu0 0.0
    %1019 = vmatprep.subr.mxu0 0.0
    %1020 = vmatpush1.msra.mxu0 0.0
    %1021 = vmatprep.subr.mxu0 0.0
    %1022 = vmatpush1.msra.mxu0 0.0
    %1023 = vmatprep.subr.mxu0 0.0
    %1024 = vmatpush1.msra.mxu0 0.0
    %1025 = vmatprep.subr.mxu0 0.0
    %1026 = vmatpush1.msra.mxu0 0.0
    %1027 = vmatprep.subr.mxu0 0.0
    %1028 = vmatpush1.msra.mxu0 0.0
    %1029 = vmatprep.mubr.f32.mxu0 0.0
    %1030 = vmatmul.mubr.f32.gmra.mrb[0].mxu0 %v963
    %v1031 = vpop.f32.mrb[0].mxu0
    %v1032 = vadd.f32 0.0, %v1031
    %v1033 = vpop.f32.mrb[0].mxu0
    %1034 = vdwg.mxu0
    %1035 = vst.msk [vmem:[#allocation2 + $0x8] sm:$0xff] %vm171, %v1032
    %1036 = vrot.lane.b32.xlu0 %v165, 120
    %v1037 = vpop.permute.xlu0 %1036
    %1038 = vrot.lane.b32.xlu0 %v165, 88
    %v1039 = vpop.permute.xlu0 %1038
    %v1040 = vsel %vm171, %v1037, 0
    %v1042 = vsel %vm171, %v1039, 0
    %1044 = vmatprep.subr.mxu0 0.0
    %1045 = vmatpush1.xpose.msra.mxu0 %v1042
    %1046 = vmatprep.subr.mxu0 0.0
    %1047 = vmatpush1.xpose.msra.mxu0 0.0
    %1048 = vmatprep.subr.mxu0 0.0
    %1049 = vmatpush1.xpose.msra.mxu0 0.0
    %1050 = vmatprep.subr.mxu0 0.0
    %1051 = vmatpush1.xpose.msra.mxu0 0.0
    %1052 = vmatprep.subr.mxu0 0.0
    %1053 = vmatpush1.xpose.msra.mxu0 0.0
    %1054 = vmatprep.subr.mxu0 0.0
    %1055 = vmatpush1.xpose.msra.mxu0 0.0
    %1056 = vmatprep.subr.mxu0 0.0
    %1057 = vmatpush1.xpose.msra.mxu0 0.0
    %1058 = vmatprep.subr.mxu0 0.0
    %1059 = vmatpush1.xpose.msra.mxu0 0.0
    %1060 = vmatprep.subr.mxu0 0.0
    %1061 = vmatpush1.xpose.msra.mxu0 0.0
    %1062 = vmatprep.subr.mxu0 0.0
    %1063 = vmatpush1.xpose.msra.mxu0 0.0
    %1064 = vmatprep.subr.mxu0 0.0
    %1065 = vmatpush1.xpose.msra.mxu0 0.0
    %1066 = vmatprep.subr.mxu0 0.0
    %1067 = vmatpush1.xpose.msra.mxu0 0.0
    %1068 = vmatprep.subr.mxu0 0.0
    %1069 = vmatpush1.xpose.msra.mxu0 0.0
    %1070 = vmatprep.subr.mxu0 0.0
    %1071 = vmatpush1.xpose.msra.mxu0 0.0
    %1072 = vmatprep.subr.mxu0 0.0
    %1073 = vmatpush1.xpose.msra.mxu0 0.0
    %1074 = vmatprep.subr.mxu0 0.0
    %1075 = vmatpush1.xpose.msra.mxu0 0.0
    %1076 = vmatprep.subr.mxu0 0.0
    %1077 = vmatpush1.xpose.msra.mxu0 0.0
    %1078 = vmatprep.subr.mxu0 0.0
    %1079 = vmatpush1.xpose.msra.mxu0 0.0
    %1080 = vmatprep.subr.mxu0 0.0
    %1081 = vmatpush1.xpose.msra.mxu0 0.0
    %1082 = vmatprep.subr.mxu0 0.0
    %1083 = vmatpush1.xpose.msra.mxu0 0.0
    %1084 = vmatprep.subr.mxu0 0.0
    %1085 = vmatpush1.xpose.msra.mxu0 0.0
    %1086 = vmatprep.subr.mxu0 0.0
    %1087 = vmatpush1.xpose.msra.mxu0 0.0
    %1088 = vmatprep.subr.mxu0 0.0
    %1089 = vmatpush1.xpose.msra.mxu0 0.0
    %1090 = vmatprep.subr.mxu0 0.0
    %1091 = vmatpush1.xpose.msra.mxu0 0.0
    %1092 = vmatprep.subr.mxu0 0.0
    %1093 = vmatpush1.xpose.msra.mxu0 0.0
    %1094 = vmatprep.subr.mxu0 0.0
    %1095 = vmatpush1.xpose.msra.mxu0 0.0
    %1096 = vmatprep.subr.mxu0 0.0
    %1097 = vmatpush1.xpose.msra.mxu0 0.0
    %1098 = vmatprep.subr.mxu0 0.0
    %1099 = vmatpush1.xpose.msra.mxu0 0.0
    %1100 = vmatprep.subr.mxu0 0.0
    %1101 = vmatpush1.xpose.msra.mxu0 0.0
    %1102 = vmatprep.subr.mxu0 0.0
    %1103 = vmatpush1.xpose.msra.mxu0 0.0
    %1104 = vmatprep.subr.mxu0 0.0
    %1105 = vmatpush1.xpose.msra.mxu0 0.0
    %1106 = vmatprep.subr.mxu0 0.0
    %1107 = vmatpush1.xpose.msra.mxu0 0.0
    %1108 = vmatprep.mubr.f32.mxu0 0.0
    %1109 = vmatmul.mubr.f32.gmra.mrb[0].mxu0 %v1040
    %v1110 = vpop.f32.mrb[0].mxu0
    %v1111 = vadd.f32 0.0, %v1110
    %v1112 = vpop.f32.mrb[0].mxu0
    %1113 = vdwg.mxu0
    %v1114 = vmul.f32 %v1111, 0.35355338
    %v1115 = vsel %vm171, %v1114, -inf
    %1116 = vmax.xlane.f32.xlu0 %v1115
    %v1117 = vpop.xlane.xlu0 %1116
    %v1118 = vsub.f32 %v1114, %v1117
    %v1119 = vmul.f32 %v1118, 1.442695
    %v1120 = vpow.pop %v1119
    %v1121 = vsel %vm171, %v1120, 0.0
    %1122 = vadd.xlane.f32.xlu0 %v1121
    %v1123 = vpop.xlane.xlu0 %1122
    %v1124 = vrcp.pop %v1123
    %v1125 = vmul.f32 1.0, %v1124
    %v1126 = vmul.f32 %v1120, %v1125
    %1128 = vrot.lane.b32.xlu0 %v1126, 8
    %v1129 = vpop.permute.xlu0 %1128
    %1131 = vst.msk [vmem:[#allocation10 + $0x8] sm:$0xff] %vm432, %v1129
    %1132 = vrot.lane.b32.xlu0 %v165, 56
    %v1133 = vpop.permute.xlu0 %1132
    %v1135 = vsel %vm171, %v1126, 0
    %1137 = vmatprep.subr.mxu0 0.0
    %1138 = vmatpush1.msra.mxu0 %v1133
    %1139 = vmatprep.subr.mxu0 0.0
    %1140 = vmatpush1.msra.mxu0 0.0
    %1141 = vmatprep.subr.mxu0 0.0
    %1142 = vmatpush1.msra.mxu0 0.0
    %1143 = vmatprep.subr.mxu0 0.0
    %1144 = vmatpush1.msra.mxu0 0.0
    %1145 = vmatprep.subr.mxu0 0.0
    %1146 = vmatpush1.msra.mxu0 0.0
    %1147 = vmatprep.subr.mxu0 0.0
    %1148 = vmatpush1.msra.mxu0 0.0
    %1149 = vmatprep.subr.mxu0 0.0
    %1150 = vmatpush1.msra.mxu0 0.0
    %1151 = vmatprep.subr.mxu0 0.0
    %1152 = vmatpush1.msra.mxu0 0.0
    %1153 = vmatprep.subr.mxu0 0.0
    %1154 = vmatpush1.msra.mxu0 0.0
    %1155 = vmatprep.subr.mxu0 0.0
    %1156 = vmatpush1.msra.mxu0 0.0
    %1157 = vmatprep.subr.mxu0 0.0
    %1158 = vmatpush1.msra.mxu0 0.0
    %1159 = vmatprep.subr.mxu0 0.0
    %1160 = vmatpush1.msra.mxu0 0.0
    %1161 = vmatprep.subr.mxu0 0.0
    %1162 = vmatpush1.msra.mxu0 0.0
    %1163 = vmatprep.subr.mxu0 0.0
    %1164 = vmatpush1.msra.mxu0 0.0
    %1165 = vmatprep.subr.mxu0 0.0
    %1166 = vmatpush1.msra.mxu0 0.0
    %1167 = vmatprep.subr.mxu0 0.0
    %1168 = vmatpush1.msra.mxu0 0.0
    %1169 = vmatprep.subr.mxu0 0.0
    %1170 = vmatpush1.msra.mxu0 0.0
    %1171 = vmatprep.subr.mxu0 0.0
    %1172 = vmatpush1.msra.mxu0 0.0
    %1173 = vmatprep.subr.mxu0 0.0
    %1174 = vmatpush1.msra.mxu0 0.0
    %1175 = vmatprep.subr.mxu0 0.0
    %1176 = vmatpush1.msra.mxu0 0.0
    %1177 = vmatprep.subr.mxu0 0.0
    %1178 = vmatpush1.msra.mxu0 0.0
    %1179 = vmatprep.subr.mxu0 0.0
    %1180 = vmatpush1.msra.mxu0 0.0
    %1181 = vmatprep.subr.mxu0 0.0
    %1182 = vmatpush1.msra.mxu0 0.0
    %1183 = vmatprep.subr.mxu0 0.0
    %1184 = vmatpush1.msra.mxu0 0.0
    %1185 = vmatprep.subr.mxu0 0.0
    %1186 = vmatpush1.msra.mxu0 0.0
    %1187 = vmatprep.subr.mxu0 0.0
    %1188 = vmatpush1.msra.mxu0 0.0
    %1189 = vmatprep.subr.mxu0 0.0
    %1190 = vmatpush1.msra.mxu0 0.0
    %1191 = vmatprep.subr.mxu0 0.0
    %1192 = vmatpush1.msra.mxu0 0.0
    %1193 = vmatprep.subr.mxu0 0.0
    %1194 = vmatpush1.msra.mxu0 0.0
    %1195 = vmatprep.subr.mxu0 0.0
    %1196 = vmatpush1.msra.mxu0 0.0
    %1197 = vmatprep.subr.mxu0 0.0
    %1198 = vmatpush1.msra.mxu0 0.0
    %1199 = vmatprep.subr.mxu0 0.0
    %1200 = vmatpush1.msra.mxu0 0.0
    %1201 = vmatprep.mubr.f32.mxu0 0.0
    %1202 = vmatmul.mubr.f32.gmra.mrb[0].mxu0 %v1135
    %v1203 = vpop.f32.mrb[0].mxu0
    %v1204 = vadd.f32 0.0, %v1203
    %v1205 = vpop.f32.mrb[0].mxu0
    %1206 = vdwg.mxu0
    %1208 = vrot.lane.b32.xlu0 %v1204, 8
    %v1209 = vpop.permute.xlu0 %1208
    %1211 = vst.msk [vmem:[#allocation2 + $0x8] sm:$0xff] %vm432, %v1209
    %1212 = vrot.lane.b32.xlu0 %v165, 112
    %v1213 = vpop.permute.xlu0 %1212
    %1214 = vrot.lane.b32.xlu0 %v165, 80
    %v1215 = vpop.permute.xlu0 %1214
    %v1216 = vsel %vm171, %v1213, 0
    %v1218 = vsel %vm171, %v1215, 0
    %1220 = vmatprep.subr.mxu0 0.0
    %1221 = vmatpush1.xpose.msra.mxu0 %v1218
    %1222 = vmatprep.subr.mxu0 0.0
    %1223 = vmatpush1.xpose.msra.mxu0 0.0
    %1224 = vmatprep.subr.mxu0 0.0
    %1225 = vmatpush1.xpose.msra.mxu0 0.0
    %1226 = vmatprep.subr.mxu0 0.0
    %1227 = vmatpush1.xpose.msra.mxu0 0.0
    %1228 = vmatprep.subr.mxu0 0.0
    %1229 = vmatpush1.xpose.msra.mxu0 0.0
    %1230 = vmatprep.subr.mxu0 0.0
    %1231 = vmatpush1.xpose.msra.mxu0 0.0
    %1232 = vmatprep.subr.mxu0 0.0
    %1233 = vmatpush1.xpose.msra.mxu0 0.0
    %1234 = vmatprep.subr.mxu0 0.0
    %1235 = vmatpush1.xpose.msra.mxu0 0.0
    %1236 = vmatprep.subr.mxu0 0.0
    %1237 = vmatpush1.xpose.msra.mxu0 0.0
    %1238 = vmatprep.subr.mxu0 0.0
    %1239 = vmatpush1.xpose.msra.mxu0 0.0
    %1240 = vmatprep.subr.mxu0 0.0
    %1241 = vmatpush1.xpose.msra.mxu0 0.0
    %1242 = vmatprep.subr.mxu0 0.0
    %1243 = vmatpush1.xpose.msra.mxu0 0.0
    %1244 = vmatprep.subr.mxu0 0.0
    %1245 = vmatpush1.xpose.msra.mxu0 0.0
    %1246 = vmatprep.subr.mxu0 0.0
    %1247 = vmatpush1.xpose.msra.mxu0 0.0
    %1248 = vmatprep.subr.mxu0 0.0
    %1249 = vmatpush1.xpose.msra.mxu0 0.0
    %1250 = vmatprep.subr.mxu0 0.0
    %1251 = vmatpush1.xpose.msra.mxu0 0.0
    %1252 = vmatprep.subr.mxu0 0.0
    %1253 = vmatpush1.xpose.msra.mxu0 0.0
    %1254 = vmatprep.subr.mxu0 0.0
    %1255 = vmatpush1.xpose.msra.mxu0 0.0
    %1256 = vmatprep.subr.mxu0 0.0
    %1257 = vmatpush1.xpose.msra.mxu0 0.0
    %1258 = vmatprep.subr.mxu0 0.0
    %1259 = vmatpush1.xpose.msra.mxu0 0.0
    %1260 = vmatprep.subr.mxu0 0.0
    %1261 = vmatpush1.xpose.msra.mxu0 0.0
    %1262 = vmatprep.subr.mxu0 0.0
    %1263 = vmatpush1.xpose.msra.mxu0 0.0
    %1264 = vmatprep.subr.mxu0 0.0
    %1265 = vmatpush1.xpose.msra.mxu0 0.0
    %1266 = vmatprep.subr.mxu0 0.0
    %1267 = vmatpush1.xpose.msra.mxu0 0.0
    %1268 = vmatprep.subr.mxu0 0.0
    %1269 = vmatpush1.xpose.msra.mxu0 0.0
    %1270 = vmatprep.subr.mxu0 0.0
    %1271 = vmatpush1.xpose.msra.mxu0 0.0
    %1272 = vmatprep.subr.mxu0 0.0
    %1273 = vmatpush1.xpose.msra.mxu0 0.0
    %1274 = vmatprep.subr.mxu0 0.0
    %1275 = vmatpush1.xpose.msra.mxu0 0.0
    %1276 = vmatprep.subr.mxu0 0.0
    %1277 = vmatpush1.xpose.msra.mxu0 0.0
    %1278 = vmatprep.subr.mxu0 0.0
    %1279 = vmatpush1.xpose.msra.mxu0 0.0
    %1280 = vmatprep.subr.mxu0 0.0
    %1281 = vmatpush1.xpose.msra.mxu0 0.0
    %1282 = vmatprep.subr.mxu0 0.0
    %1283 = vmatpush1.xpose.msra.mxu0 0.0
    %1284 = vmatprep.mubr.f32.mxu0 0.0
    %1285 = vmatmul.mubr.f32.gmra.mrb[0].mxu0 %v1216
    %v1286 = vpop.f32.mrb[0].mxu0
    %v1287 = vadd.f32 0.0, %v1286
    %v1288 = vpop.f32.mrb[0].mxu0
    %1289 = vdwg.mxu0
    %v1290 = vmul.f32 %v1287, 0.35355338
    %v1291 = vsel %vm171, %v1290, -inf
    %1292 = vmax.xlane.f32.xlu0 %v1291
    %v1293 = vpop.xlane.xlu0 %1292
    %v1294 = vsub.f32 %v1290, %v1293
    %v1295 = vmul.f32 %v1294, 1.442695
    %v1296 = vpow.pop %v1295
    %v1297 = vsel %vm171, %v1296, 0.0
    %1298 = vadd.xlane.f32.xlu0 %v1297
    %v1299 = vpop.xlane.xlu0 %1298
    %v1300 = vrcp.pop %v1299
    %v1301 = vmul.f32 1.0, %v1300
    %v1302 = vmul.f32 %v1296, %v1301
    %1304 = vrot.lane.b32.xlu0 %v1302, 16
    %v1305 = vpop.permute.xlu0 %1304
    %1307 = vst.msk [vmem:[#allocation10 + $0x8] sm:$0xff] %vm609, %v1305
    %1308 = vrot.lane.b32.xlu0 %v165, 48
    %v1309 = vpop.permute.xlu0 %1308
    %v1311 = vsel %vm171, %v1302, 0
    %1313 = vmatprep.subr.mxu0 0.0
    %1314 = vmatpush1.msra.mxu0 %v1309
    %1315 = vmatprep.subr.mxu0 0.0
    %1316 = vmatpush1.msra.mxu0 0.0
    %1317 = vmatprep.subr.mxu0 0.0
    %1318 = vmatpush1.msra.mxu0 0.0
    %1319 = vmatprep.subr.mxu0 0.0
    %1320 = vmatpush1.msra.mxu0 0.0
    %1321 = vmatprep.subr.mxu0 0.0
    %1322 = vmatpush1.msra.mxu0 0.0
    %1323 = vmatprep.subr.mxu0 0.0
    %1324 = vmatpush1.msra.mxu0 0.0
    %1325 = vmatprep.subr.mxu0 0.0
    %1326 = vmatpush1.msra.mxu0 0.0
    %1327 = vmatprep.subr.mxu0 0.0
    %1328 = vmatpush1.msra.mxu0 0.0
    %1329 = vmatprep.subr.mxu0 0.0
    %1330 = vmatpush1.msra.mxu0 0.0
    %1331 = vmatprep.subr.mxu0 0.0
    %1332 = vmatpush1.msra.mxu0 0.0
    %1333 = vmatprep.subr.mxu0 0.0
    %1334 = vmatpush1.msra.mxu0 0.0
    %1335 = vmatprep.subr.mxu0 0.0
    %1336 = vmatpush1.msra.mxu0 0.0
    %1337 = vmatprep.subr.mxu0 0.0
    %1338 = vmatpush1.msra.mxu0 0.0
    %1339 = vmatprep.subr.mxu0 0.0
    %1340 = vmatpush1.msra.mxu0 0.0
    %1341 = vmatprep.subr.mxu0 0.0
    %1342 = vmatpush1.msra.mxu0 0.0
    %1343 = vmatprep.subr.mxu0 0.0
    %1344 = vmatpush1.msra.mxu0 0.0
    %1345 = vmatprep.subr.mxu0 0.0
    %1346 = vmatpush1.msra.mxu0 0.0
    %1347 = vmatprep.subr.mxu0 0.0
    %1348 = vmatpush1.msra.mxu0 0.0
    %1349 = vmatprep.subr.mxu0 0.0
    %1350 = vmatpush1.msra.mxu0 0.0
    %1351 = vmatprep.subr.mxu0 0.0
    %1352 = vmatpush1.msra.mxu0 0.0
    %1353 = vmatprep.subr.mxu0 0.0
    %1354 = vmatpush1.msra.mxu0 0.0
    %1355 = vmatprep.subr.mxu0 0.0
    %1356 = vmatpush1.msra.mxu0 0.0
    %1357 = vmatprep.subr.mxu0 0.0
    %1358 = vmatpush1.msra.mxu0 0.0
    %1359 = vmatprep.subr.mxu0 0.0
    %1360 = vmatpush1.msra.mxu0 0.0
    %1361 = vmatprep.subr.mxu0 0.0
    %1362 = vmatpush1.msra.mxu0 0.0
    %1363 = vmatprep.subr.mxu0 0.0
    %1364 = vmatpush1.msra.mxu0 0.0
    %1365 = vmatprep.subr.mxu0 0.0
    %1366 = vmatpush1.msra.mxu0 0.0
    %1367 = vmatprep.subr.mxu0 0.0
    %1368 = vmatpush1.msra.mxu0 0.0
    %1369 = vmatprep.subr.mxu0 0.0
    %1370 = vmatpush1.msra.mxu0 0.0
    %1371 = vmatprep.subr.mxu0 0.0
    %1372 = vmatpush1.msra.mxu0 0.0
    %1373 = vmatprep.subr.mxu0 0.0
    %1374 = vmatpush1.msra.mxu0 0.0
    %1375 = vmatprep.subr.mxu0 0.0
    %1376 = vmatpush1.msra.mxu0 0.0
    %1377 = vmatprep.mubr.f32.mxu0 0.0
    %1378 = vmatmul.mubr.f32.gmra.mrb[0].mxu0 %v1311
    %v1379 = vpop.f32.mrb[0].mxu0
    %v1380 = vadd.f32 0.0, %v1379
    %v1381 = vpop.f32.mrb[0].mxu0
    %1382 = vdwg.mxu0
    %1384 = vrot.lane.b32.xlu0 %v1380, 16
    %v1385 = vpop.permute.xlu0 %1384
    %1387 = vst.msk [vmem:[#allocation2 + $0x8] sm:$0xff] %vm609, %v1385
    %1388 = vrot.lane.b32.xlu0 %v165, 104
    %v1389 = vpop.permute.xlu0 %1388
    %1390 = vrot.lane.b32.xlu0 %v165, 72
    %v1391 = vpop.permute.xlu0 %1390
    %v1392 = vsel %vm171, %v1389, 0
    %v1394 = vsel %vm171, %v1391, 0
    %1396 = vmatprep.subr.mxu0 0.0
    %1397 = vmatpush1.xpose.msra.mxu0 %v1394
    %1398 = vmatprep.subr.mxu0 0.0
    %1399 = vmatpush1.xpose.msra.mxu0 0.0
    %1400 = vmatprep.subr.mxu0 0.0
    %1401 = vmatpush1.xpose.msra.mxu0 0.0
    %1402 = vmatprep.subr.mxu0 0.0
    %1403 = vmatpush1.xpose.msra.mxu0 0.0
    %1404 = vmatprep.subr.mxu0 0.0
    %1405 = vmatpush1.xpose.msra.mxu0 0.0
    %1406 = vmatprep.subr.mxu0 0.0
    %1407 = vmatpush1.xpose.msra.mxu0 0.0
    %1408 = vmatprep.subr.mxu0 0.0
    %1409 = vmatpush1.xpose.msra.mxu0 0.0
    %1410 = vmatprep.subr.mxu0 0.0
    %1411 = vmatpush1.xpose.msra.mxu0 0.0
    %1412 = vmatprep.subr.mxu0 0.0
    %1413 = vmatpush1.xpose.msra.mxu0 0.0
    %1414 = vmatprep.subr.mxu0 0.0
    %1415 = vmatpush1.xpose.msra.mxu0 0.0
    %1416 = vmatprep.subr.mxu0 0.0
    %1417 = vmatpush1.xpose.msra.mxu0 0.0
    %1418 = vmatprep.subr.mxu0 0.0
    %1419 = vmatpush1.xpose.msra.mxu0 0.0
    %1420 = vmatprep.subr.mxu0 0.0
    %1421 = vmatpush1.xpose.msra.mxu0 0.0
    %1422 = vmatprep.subr.mxu0 0.0
    %1423 = vmatpush1.xpose.msra.mxu0 0.0
    %1424 = vmatprep.subr.mxu0 0.0
    %1425 = vmatpush1.xpose.msra.mxu0 0.0
    %1426 = vmatprep.subr.mxu0 0.0
    %1427 = vmatpush1.xpose.msra.mxu0 0.0
    %1428 = vmatprep.subr.mxu0 0.0
    %1429 = vmatpush1.xpose.msra.mxu0 0.0
    %1430 = vmatprep.subr.mxu0 0.0
    %1431 = vmatpush1.xpose.msra.mxu0 0.0
    %1432 = vmatprep.subr.mxu0 0.0
    %1433 = vmatpush1.xpose.msra.mxu0 0.0
    %1434 = vmatprep.subr.mxu0 0.0
    %1435 = vmatpush1.xpose.msra.mxu0 0.0
    %1436 = vmatprep.subr.mxu0 0.0
    %1437 = vmatpush1.xpose.msra.mxu0 0.0
    %1438 = vmatprep.subr.mxu0 0.0
    %1439 = vmatpush1.xpose.msra.mxu0 0.0
    %1440 = vmatprep.subr.mxu0 0.0
    %1441 = vmatpush1.xpose.msra.mxu0 0.0
    %1442 = vmatprep.subr.mxu0 0.0
    %1443 = vmatpush1.xpose.msra.mxu0 0.0
    %1444 = vmatprep.subr.mxu0 0.0
    %1445 = vmatpush1.xpose.msra.mxu0 0.0
    %1446 = vmatprep.subr.mxu0 0.0
    %1447 = vmatpush1.xpose.msra.mxu0 0.0
    %1448 = vmatprep.subr.mxu0 0.0
    %1449 = vmatpush1.xpose.msra.mxu0 0.0
    %1450 = vmatprep.subr.mxu0 0.0
    %1451 = vmatpush1.xpose.msra.mxu0 0.0
    %1452 = vmatprep.subr.mxu0 0.0
    %1453 = vmatpush1.xpose.msra.mxu0 0.0
    %1454 = vmatprep.subr.mxu0 0.0
    %1455 = vmatpush1.xpose.msra.mxu0 0.0
    %1456 = vmatprep.subr.mxu0 0.0
    %1457 = vmatpush1.xpose.msra.mxu0 0.0
    %1458 = vmatprep.subr.mxu0 0.0
    %1459 = vmatpush1.xpose.msra.mxu0 0.0
    %1460 = vmatprep.mubr.f32.mxu0 0.0
    %1461 = vmatmul.mubr.f32.gmra.mrb[0].mxu0 %v1392
    %v1462 = vpop.f32.mrb[0].mxu0
    %v1463 = vadd.f32 0.0, %v1462
    %v1464 = vpop.f32.mrb[0].mxu0
    %1465 = vdwg.mxu0
    %v1466 = vmul.f32 %v1463, 0.35355338
    %v1467 = vsel %vm171, %v1466, -inf
    %1468 = vmax.xlane.f32.xlu0 %v1467
    %v1469 = vpop.xlane.xlu0 %1468
    %v1470 = vsub.f32 %v1466, %v1469
    %v1471 = vmul.f32 %v1470, 1.442695
    %v1472 = vpow.pop %v1471
    %v1473 = vsel %vm171, %v1472, 0.0
    %1474 = vadd.xlane.f32.xlu0 %v1473
    %v1475 = vpop.xlane.xlu0 %1474
    %v1476 = vrcp.pop %v1475
    %v1477 = vmul.f32 1.0, %v1476
    %v1478 = vmul.f32 %v1472, %v1477
    %1480 = vrot.lane.b32.xlu0 %v1478, 24
    %v1481 = vpop.permute.xlu0 %1480
    %1483 = vst.msk [vmem:[#allocation10 + $0x8] sm:$0xff] %vm786, %v1481
    %1484 = vrot.lane.b32.xlu0 %v165, 40
    %v1485 = vpop.permute.xlu0 %1484
    %v1487 = vsel %vm171, %v1478, 0
    %1489 = vmatprep.subr.mxu0 0.0
    %1490 = vmatpush1.msra.mxu0 %v1485
    %1491 = vmatprep.subr.mxu0 0.0
    %1492 = vmatpush1.msra.mxu0 0.0
    %1493 = vmatprep.subr.mxu0 0.0
    %1494 = vmatpush1.msra.mxu0 0.0
    %1495 = vmatprep.subr.mxu0 0.0
    %1496 = vmatpush1.msra.mxu0 0.0
    %1497 = vmatprep.subr.mxu0 0.0
    %1498 = vmatpush1.msra.mxu0 0.0
    %1499 = vmatprep.subr.mxu0 0.0
    %1500 = vmatpush1.msra.mxu0 0.0
    %1501 = vmatprep.subr.mxu0 0.0
    %1502 = vmatpush1.msra.mxu0 0.0
    %1503 = vmatprep.subr.mxu0 0.0
    %1504 = vmatpush1.msra.mxu0 0.0
    %1505 = vmatprep.subr.mxu0 0.0
    %1506 = vmatpush1.msra.mxu0 0.0
    %1507 = vmatprep.subr.mxu0 0.0
    %1508 = vmatpush1.msra.mxu0 0.0
    %1509 = vmatprep.subr.mxu0 0.0
    %1510 = vmatpush1.msra.mxu0 0.0
    %1511 = vmatprep.subr.mxu0 0.0
    %1512 = vmatpush1.msra.mxu0 0.0
    %1513 = vmatprep.subr.mxu0 0.0
    %1514 = vmatpush1.msra.mxu0 0.0
    %1515 = vmatprep.subr.mxu0 0.0
    %1516 = vmatpush1.msra.mxu0 0.0
    %1517 = vmatprep.subr.mxu0 0.0
    %1518 = vmatpush1.msra.mxu0 0.0
    %1519 = vmatprep.subr.mxu0 0.0
    %1520 = vmatpush1.msra.mxu0 0.0
    %1521 = vmatprep.subr.mxu0 0.0
    %1522 = vmatpush1.msra.mxu0 0.0
    %1523 = vmatprep.subr.mxu0 0.0
    %1524 = vmatpush1.msra.mxu0 0.0
    %1525 = vmatprep.subr.mxu0 0.0
    %1526 = vmatpush1.msra.mxu0 0.0
    %1527 = vmatprep.subr.mxu0 0.0
    %1528 = vmatpush1.msra.mxu0 0.0
    %1529 = vmatprep.subr.mxu0 0.0
    %1530 = vmatpush1.msra.mxu0 0.0
    %1531 = vmatprep.subr.mxu0 0.0
    %1532 = vmatpush1.msra.mxu0 0.0
    %1533 = vmatprep.subr.mxu0 0.0
    %1534 = vmatpush1.msra.mxu0 0.0
    %1535 = vmatprep.subr.mxu0 0.0
    %1536 = vmatpush1.msra.mxu0 0.0
    %1537 = vmatprep.subr.mxu0 0.0
    %1538 = vmatpush1.msra.mxu0 0.0
    %1539 = vmatprep.subr.mxu0 0.0
    %1540 = vmatpush1.msra.mxu0 0.0
    %1541 = vmatprep.subr.mxu0 0.0
    %1542 = vmatpush1.msra.mxu0 0.0
    %1543 = vmatprep.subr.mxu0 0.0
    %1544 = vmatpush1.msra.mxu0 0.0
    %1545 = vmatprep.subr.mxu0 0.0
    %1546 = vmatpush1.msra.mxu0 0.0
    %1547 = vmatprep.subr.mxu0 0.0
    %1548 = vmatpush1.msra.mxu0 0.0
    %1549 = vmatprep.subr.mxu0 0.0
    %1550 = vmatpush1.msra.mxu0 0.0
    %1551 = vmatprep.subr.mxu0 0.0
    %1552 = vmatpush1.msra.mxu0 0.0
    %1553 = vmatprep.mubr.f32.mxu0 0.0
    %1554 = vmatmul.mubr.f32.gmra.mrb[0].mxu0 %v1487
    %v1555 = vpop.f32.mrb[0].mxu0
    %v1556 = vadd.f32 0.0, %v1555
    %v1557 = vpop.f32.mrb[0].mxu0
    %1558 = vdwg.mxu0
    %1560 = vrot.lane.b32.xlu0 %v1556, 24
    %v1561 = vpop.permute.xlu0 %1560
    %1563 = vst.msk [vmem:[#allocation2 + $0x8] sm:$0xff] %vm786, %v1561
    %v1564 = vld [vmem:[#allocation2] sm:$0xff]
    %v1565 = vld [vmem:[#allocation2 + $0x8] sm:$0xff]
    %v1566 = vld [vmem:[#allocation8] sm:$0xff]
    %v1567 = vld [vmem:[#allocation8 + $0x8] sm:$0xff]
    %v1568 = vld [vmem:[#allocation8 + $0x10] sm:$0xff]
    %v1569 = vld [vmem:[#allocation8 + $0x18] sm:$0xff]
    %v1570 = vld [vmem:[%s4] sm:$0x1]
    %v1572 = vlaneseq
    %v1573 = vshrl.u32 %v1572, 7
    %v1574 = vsub.s32 0, %v1573
    %v1575 = vrot.slane %v1570, %v1574
    %vm1577 = vcmask 261120
    %v1579 = vsel %vm1577, %v1564, 0
    %v1582 = vsel %vm1577, %v1565, 0
    %1584 = vmatprep.subr.mxu0 0.0
    %1585 = vmatpush1.msra.mxu0 %v1566
    %1586 = vmatprep.subr.mxu0 0.0
    %1587 = vmatpush1.msra.mxu0 %v1567
    %1588 = vmatprep.subr.mxu0 0.0
    %1589 = vmatpush1.msra.mxu0 %v1568
    %1590 = vmatprep.subr.mxu0 0.0
    %1591 = vmatpush1.msra.mxu0 %v1569
    %1592 = vmatprep.subr.mxu0 0.0
    %1593 = vmatpush1.msra.mxu0 0.0
    %1594 = vmatprep.subr.mxu0 0.0
    %1595 = vmatpush1.msra.mxu0 0.0
    %1596 = vmatprep.subr.mxu0 0.0
    %1597 = vmatpush1.msra.mxu0 0.0
    %1598 = vmatprep.subr.mxu0 0.0
    %1599 = vmatpush1.msra.mxu0 0.0
    %1600 = vmatprep.subr.mxu0 0.0
    %1601 = vmatpush1.msra.mxu0 0.0
    %1602 = vmatprep.subr.mxu0 0.0
    %1603 = vmatpush1.msra.mxu0 0.0
    %1604 = vmatprep.subr.mxu0 0.0
    %1605 = vmatpush1.msra.mxu0 0.0
    %1606 = vmatprep.subr.mxu0 0.0
    %1607 = vmatpush1.msra.mxu0 0.0
    %1608 = vmatprep.subr.mxu0 0.0
    %1609 = vmatpush1.msra.mxu0 0.0
    %1610 = vmatprep.subr.mxu0 0.0
    %1611 = vmatpush1.msra.mxu0 0.0
    %1612 = vmatprep.subr.mxu0 0.0
    %1613 = vmatpush1.msra.mxu0 0.0
    %1614 = vmatprep.subr.mxu0 0.0
    %1615 = vmatpush1.msra.mxu0 0.0
    %1616 = vmatprep.subr.mxu0 0.0
    %1617 = vmatpush1.msra.mxu0 0.0
    %1618 = vmatprep.subr.mxu0 0.0
    %1619 = vmatpush1.msra.mxu0 0.0
    %1620 = vmatprep.subr.mxu0 0.0
    %1621 = vmatpush1.msra.mxu0 0.0
    %1622 = vmatprep.subr.mxu0 0.0
    %1623 = vmatpush1.msra.mxu0 0.0
    %1624 = vmatprep.subr.mxu0 0.0
    %1625 = vmatpush1.msra.mxu0 0.0
    %1626 = vmatprep.subr.mxu0 0.0
    %1627 = vmatpush1.msra.mxu0 0.0
    %1628 = vmatprep.subr.mxu0 0.0
    %1629 = vmatpush1.msra.mxu0 0.0
    %1630 = vmatprep.subr.mxu0 0.0
    %1631 = vmatpush1.msra.mxu0 0.0
    %1632 = vmatprep.subr.mxu0 0.0
    %1633 = vmatpush1.msra.mxu0 0.0
    %1634 = vmatprep.subr.mxu0 0.0
    %1635 = vmatpush1.msra.mxu0 0.0
    %1636 = vmatprep.subr.mxu0 0.0
    %1637 = vmatpush1.msra.mxu0 0.0
    %1638 = vmatprep.subr.mxu0 0.0
    %1639 = vmatpush1.msra.mxu0 0.0
    %1640 = vmatprep.subr.mxu0 0.0
    %1641 = vmatpush1.msra.mxu0 0.0
    %1642 = vmatprep.subr.mxu0 0.0
    %1643 = vmatpush1.msra.mxu0 0.0
    %1644 = vmatprep.subr.mxu0 0.0
    %1645 = vmatpush1.msra.mxu0 0.0
    %1646 = vmatprep.subr.mxu0 0.0
    %1647 = vmatpush1.msra.mxu0 0.0
    %1648 = vmatprep.mubr.f32.mxu0 0.0
    %1649 = vmatmul.mubr.f32.gmra.mrb[0].mxu0 %v1579
    %v1650 = vpop.f32.mrb[0].mxu0
    %v1651 = vadd.f32 %v1575, %v1650
    %v1652 = vpop.f32.mrb[0].mxu0
    %1653 = vmatprep.mubr.f32.mxu0 0.0
    %1654 = vmatmul.mubr.f32.gmra.mrb[0].mxu0 %v1582
    %v1655 = vpop.f32.mrb[0].mxu0
    %v1656 = vadd.f32 %v1575, %v1655
    %v1657 = vpop.f32.mrb[0].mxu0
    %1658 = vdwg.mxu0
    %1659 = vst.msk [vmem:[#allocation9] sm:$0xff] %vm1577, %v1651
    %1660 = vst.msk [vmem:[#allocation9 + $0x8] sm:$0xff] %vm1577, %v1656
    // Predicated region
    $region34: #{tpu_custom_call.1} parent=1 // pred_check
      _
    $region35: #{tpu_custom_call.1} parent=1 // pred_check_branch
      %1662 = sbr.rel (0) target = $region37
    $region36: #{tpu_custom_call.1} parent=1 // pred_region
      %s1664 = ssub.s32 256, 256
      %1665 = vsyncadd [#allocation5], %s1664
      %s1666 = sshll.u32 [#allocation9], 4
      %s1667 = int_to_ptr.vmem [resolvable:$true] %s1666
      %1672 = dma.vmem_to_hbm [thread:$0]  %s1667, 256, %s5, [#allocation5], 128, 128, 8
    $region37: #{tpu_custom_call.1} parent=1 // pred_fallthru
      _
    // Predicated region
    $region38: #{tpu_custom_call.1} parent=1 // pred_check
      _
    $region39: #{tpu_custom_call.1} parent=1 // pred_check_branch
      %1674 = sbr.rel (0) target = $region41
    $region40: #{tpu_custom_call.1} parent=1 // pred_region
      %s1676 = ssub.s32 256, 256
      %1677 = vsyncadd [#allocation11], %s1676
      %s1678 = sshll.u32 [#allocation10], 4
      %s1679 = int_to_ptr.vmem [resolvable:$true] %s1678
      %1684 = dma.vmem_to_hbm [thread:$0]  %s1679, 256, %s6, [#allocation11], 128, 128, 8
    $region41: #{tpu_custom_call.1} parent=1 // pred_fallthru
      _
    // Predicated region
    $region42: #{tpu_custom_call.1} parent=1 // pred_check
      _
    $region43: #{tpu_custom_call.1} parent=1 // pred_check_branch
      %1686 = sbr.rel (0) target = $region45
    $region44: #{tpu_custom_call.1} parent=1 // pred_region
      %1687 = dma.done [#allocation5], 256
    $region45: #{tpu_custom_call.1} parent=1 // pred_fallthru
      _
    // Predicated region
    $region46: #{tpu_custom_call.1} parent=1 // pred_check
      _
    $region47: #{tpu_custom_call.1} parent=1 // pred_check_branch
      %1689 = sbr.rel (0) target = $region49
    $region48: #{tpu_custom_call.1} parent=1 // pred_region
      %1690 = dma.done [#allocation11], 256
    $region49: #{tpu_custom_call.1} parent=1 // pred_fallthru
      _
    %1691 = vsyncpa [#allocation4], 1
    %1692 = vsyncpa [#allocation7], 1
    %1693 = vsyncpa [#allocation5], 1
    %1694 = vsyncpa [#allocation11], 1

</llo_original>
